<compile_context>
chip_gen: v7x
topology: tpu7x:2x2x1
jax: 0.10.0
libtpu: 0.0.40
codegen_flags: <defaults>
</compile_context>

<pallas_src>
import jax
import jax.numpy as jnp
from jax.experimental import pallas as pl
from jax.experimental.pallas import tpu as pltpu


def _round_up(x, m):
    return ((x + m - 1) // m) * m


def _choose_tb(B):
    """Batch tile heuristic (see header comment)."""
    B16 = _round_up(B, 16)
    if B <= 64:
        return B16
    if B <= 1024:
        # >= 2 grid steps so the "parallel" batch axis can shard across
        # v7x's two TensorCores.
        return _round_up((B16 + 1) // 2, 16)
    # Large batch: prefer the tile with the least padding waste, ties -> larger.
    candidates = (512, 256, 128)
    return min(candidates, key=lambda t: (_round_up(B, t) - B, -t))


def _const_block_spec(shape):
    """BlockSpec for a block that is identical at every grid step.

    Single-buffered (pipeline_mode=pl.Buffered(1)): the second pipeline buffer
    is never used since the index_map is constant, so dropping it halves the
    weight VMEM footprint.  Falls back to a plain spec if the running jax
    version does not expose pipeline_mode.
    """
    index_map = lambda i, k: (0, 0)
    try:
        return pl.BlockSpec(shape, index_map, pipeline_mode=pl.Buffered(1))
    except TypeError:
        return pl.BlockSpec(shape, index_map)


def dqn_kernel(x_ref, w1_ref, b1_ref, w2_ref, b2_ref, w3_ref, b3_ref,
               o_ref, acc_ref):
    k = pl.program_id(1)

    @pl.when(k == 0)
    def _():
        acc_ref[...] = jnp.zeros_like(acc_ref)

    # Layer-1 partial product for this K chunk.  x arrives as f32 and is cast
    # to bf16 on the VPU (hidden under the MXU work); accumulate in f32.
    xk = x_ref[...].astype(w1_ref.dtype)
    acc_ref[...] += jnp.dot(xk, w1_ref[...], preferred_element_type=jnp.float32)

    # Finalize on the last K step: bias + ReLU, then layers 2 and 3.
    @pl.when(k == pl.num_programs(1) - 1)
    def _():
        h1 = jnp.maximum(acc_ref[...] + b1_ref[...], 0.0)
        h2 = jnp.dot(h1.astype(w2_ref.dtype), w2_ref[...],
                     preferred_element_type=jnp.float32)
        h2 = jnp.maximum(h2 + b2_ref[...], 0.0)
        o_ref[...] = jnp.dot(h2.astype(w3_ref.dtype), w3_ref[...],
                             preferred_element_type=jnp.float32) + b3_ref[...]


def dqn_forward(x, params, *, tb=None, tk=None, compute_dtype=jnp.bfloat16,
                vmem_limit_bytes=None):
    """x: any shape (B, ...); flattened to (B, n_in) exactly like nn.Flatten."""
    w1, b1, w2, b2, w3, b3 = params
    B = x.shape[0]
    x2d = x.reshape(B, -1)
    n_in = x2d.shape[1]
    hidden = w1.shape[1]
    n_out = w3.shape[1]

    # Batch tiling.
    if tb is None:
        tb = _choose_tb(B)
    B_pad = _round_up(B, tb)

    # K (n_in) tiling: lane-dense multiple of 128, streamed in <=2048 chunks.
    n_in_p = _round_up(n_in, 128)
    if tk is None:
        tk = n_in_p if n_in_p <= 2048 else 2048
    tk = min(tk, n_in_p)
    n_in_p = _round_up(n_in_p, tk)        # blocks divide evenly (zero padding)

    # Lane-dense output columns.
    n_out_p = _round_up(n_out, 128)

    # x stays f32 (cast to bf16 inside the kernel); pad only if needed.
    xc = x2d.astype(jnp.float32)
    if (B_pad != B) or (n_in_p != n_in):
        xc = jnp.pad(xc, ((0, B_pad - B), (0, n_in_p - n_in)))

    # bf16 weights, f32 biases (added to the f32 accumulator).
    w1c = w1.astype(compute_dtype)
    if n_in_p != n_in:
        w1c = jnp.pad(w1c, ((0, n_in_p - n_in), (0, 0)))
    w2c = w2.astype(compute_dtype)
    w3c = w3.astype(compute_dtype)
    b1c = b1.astype(jnp.float32).reshape(1, hidden)
    b2c = b2.astype(jnp.float32).reshape(1, hidden)
    b3c = b3.astype(jnp.float32).reshape(1, n_out)
    if n_out_p != n_out:
        w3c = jnp.pad(w3c, ((0, 0), (0, n_out_p - n_out)))
        b3c = jnp.pad(b3c, ((0, 0), (0, n_out_p - n_out)))

    grid = (B_pad // tb, n_in_p // tk)

    # Chip-aware scoped VMEM limit: 3/4 of physical VMEM (48 MiB on v7x,
    # ~96 MiB on v5e/v6e), capped at 100 MiB; conservative fallback otherwise.
    if vmem_limit_bytes is None:
        try:
            cap = pltpu.get_tpu_info().vmem_capacity_bytes
            vmem_limit_bytes = min(int(cap * 3 // 4), 100 * 1024 * 1024)
        except Exception:
            vmem_limit_bytes = 48 * 1024 * 1024

    bpe = jnp.dtype(compute_dtype).itemsize
    flops = 2 * B_pad * (n_in_p * hidden + hidden * hidden + hidden * n_out_p)
    bytes_accessed = int(
        B_pad * n_in_p * 4                                           # x (f32)
        + (n_in_p * hidden + hidden * hidden + hidden * n_out_p) * bpe
        + (2 * hidden + n_out_p) * 4                                 # biases
        + B_pad * n_out_p * 4                                        # logits
    )

    out = pl.pallas_call(
        dqn_kernel,
        out_shape=jax.ShapeDtypeStruct((B_pad, n_out_p), jnp.float32),
        grid_spec=pltpu.PrefetchScalarGridSpec(
            num_scalar_prefetch=0,
            grid=grid,
            in_specs=[
                pl.BlockSpec((tb, tk), lambda i, k: (i, k)),      # x (K-streamed)
                pl.BlockSpec((tk, hidden), lambda i, k: (k, 0)),  # W1 (K-streamed)
                _const_block_spec((1, hidden)),                   # b1
                _const_block_spec((hidden, hidden)),              # W2
                _const_block_spec((1, hidden)),                   # b2
                _const_block_spec((hidden, n_out_p)),             # W3 (padded)
                _const_block_spec((1, n_out_p)),                  # b3 (padded)
            ],
            out_specs=pl.BlockSpec((tb, n_out_p), lambda i, k: (i, 0)),
            scratch_shapes=[pltpu.VMEM((tb, hidden), jnp.float32)],
        ),
        compiler_params=pltpu.CompilerParams(
            dimension_semantics=("parallel", "arbitrary"),
            vmem_limit_bytes=vmem_limit_bytes,
        ),
        cost_estimate=pl.CostEstimate(
            flops=flops, transcendentals=0, bytes_accessed=bytes_accessed),
    )(xc, w1c, b1c, w2c, b2c, w3c, b3c)

    return out[:B, :n_out]


def init_dqn_params(key, n_input, n_output, hidden=512):
    """Deterministic init mimicking PyTorch's U(-1/sqrt(fan_in), 1/sqrt(fan_in))."""
    ks = jax.random.split(key, 6)

    def uniform(k, shape, fan_in):
        bound = 1.0 / jnp.sqrt(jnp.float32(fan_in))
        return jax.random.uniform(k, shape, jnp.float32, -bound, bound)

    w1 = uniform(ks[0], (n_input, hidden), n_input)
    b1 = uniform(ks[1], (1, hidden), n_input)
    w2 = uniform(ks[2], (hidden, hidden), hidden)
    b2 = uniform(ks[3], (1, hidden), hidden)
    w3 = uniform(ks[4], (hidden, n_output), hidden)
    b3 = uniform(ks[5], (1, n_output), hidden)
    return (w1, b1, w2, b2, w3, b3)


def dqn_reference(x, params, compute_dtype=jnp.bfloat16):
    """Pure-JAX reference with the same bf16-operand / f32-accumulate precision."""
    w1, b1, w2, b2, w3, b3 = params
    x2d = x.reshape(x.shape[0], -1).astype(compute_dtype)
    h1 = jnp.maximum(
        jnp.dot(x2d, w1.astype(compute_dtype),
                preferred_element_type=jnp.float32) + b1, 0.0)
    h2 = jnp.maximum(
        jnp.dot(h1.astype(compute_dtype), w2.astype(compute_dtype),
                preferred_element_type=jnp.float32) + b2, 0.0)
    return jnp.dot(h2.astype(compute_dtype), w3.astype(compute_dtype),
                   preferred_element_type=jnp.float32) + b3


if __name__ == "__main__":
    key = jax.random.PRNGKey(0)
    k_x, k_x2, k_p = jax.random.split(key, 3)

    # Small observation-like input: (B=2, C=4, H=16, W=16) -> n_input = 1024.
    B, C, H, W = 2, 4, 16, 16
    n_input = C * H * W
    n_output = 6  # number of discrete actions (exercises lane padding to 128)

    x = jax.random.normal(k_x, (B, C, H, W), dtype=jnp.float32)
    params = init_dqn_params(k_p, n_input, n_output)

    # Default path (single K step: tk == n_in).
    logits = dqn_forward(x, params)
    logits = jax.block_until_ready(logits)
    ref = dqn_reference(x, params)
    assert logits.shape == (B, n_output)
    assert jnp.allclose(logits, ref, atol=1e-2, rtol=1e-2), "mismatch vs reference"

    # Multi-K-step path (tk=256 -> 4 K chunks) with an awkward batch (B=5)
    # to exercise the f32-scratch accumulation and batch padding.
    x2 = jax.random.normal(k_x2, (5, C, H, W), dtype=jnp.float32)
    logits2 = jax.block_until_ready(dqn_forward(x2, params, tk=256))
    ref2 = dqn_reference(x2, params)
    assert logits2.shape == (5, n_output)
    assert jnp.allclose(logits2, ref2, atol=1e-2, rtol=1e-2), "mismatch (K-tiled)"

    print("KERNEL_OK")
</pallas_src>

<mosaic_0001>
module attributes {stable_mosaic.version = 11 : i64} {
  func.func @dqn_kernel(%arg0: i32, %arg1: i32, %arg2: memref<16x1024xf32, #tpu.memory_space<vmem>>, %arg3: memref<1024x512xbf16, #tpu.memory_space<vmem>>, %arg4: memref<1x512xf32, #tpu.memory_space<vmem>>, %arg5: memref<512x512xbf16, #tpu.memory_space<vmem>>, %arg6: memref<1x512xf32, #tpu.memory_space<vmem>>, %arg7: memref<512x128xbf16, #tpu.memory_space<vmem>>, %arg8: memref<1x128xf32, #tpu.memory_space<vmem>>, %arg9: memref<16x128xf32, #tpu.memory_space<vmem>>, %arg10: memref<16x512xf32, #tpu.memory_space<vmem>>) attributes {dimension_semantics = [#tpu.dimension_semantics<parallel>, #tpu.dimension_semantics<arbitrary>], iteration_bounds = array<i64: 1, 1>, scalar_prefetch = 0 : i64, scratch_operands = 1 : i64, tpu.core_type = #tpu.core_type<tc>, window_params = [{transform_indices = @transform_0, window_bounds = array<i64: 16, 1024>}, {transform_indices = @transform_1, window_bounds = array<i64: 1024, 512>}, {pipeline_mode = #tpu.pipeline_mode<synchronous>, transform_indices = @transform_2, window_bounds = array<i64: 1, 512>}, {pipeline_mode = #tpu.pipeline_mode<synchronous>, transform_indices = @transform_3, window_bounds = array<i64: 512, 512>}, {pipeline_mode = #tpu.pipeline_mode<synchronous>, transform_indices = @transform_4, window_bounds = array<i64: 1, 512>}, {pipeline_mode = #tpu.pipeline_mode<synchronous>, transform_indices = @transform_5, window_bounds = array<i64: 512, 128>}, {pipeline_mode = #tpu.pipeline_mode<synchronous>, transform_indices = @transform_6, window_bounds = array<i64: 1, 128>}, {transform_indices = @transform_7, window_bounds = array<i64: 16, 128>}]} {
    %c0_i32 = arith.constant 0 : i32
    %0 = arith.cmpi eq, %arg1, %c0_i32 : i32
    %1 = arith.extui %0 : i1 to i32
    %c0_i32_0 = arith.constant 0 : i32
    %2 = arith.cmpi ne, %1, %c0_i32_0 : i32
    scf.if %2 {
      %cst_10 = arith.constant 0.000000e+00 : f32
      %13 = vector.broadcast %cst_10 : f32 to vector<16x512xf32>
      %c0_11 = arith.constant 0 : index
      %c0_12 = arith.constant 0 : index
      %14 = vector.load %arg10[%c0_11, %c0_12] : memref<16x512xf32, #tpu.memory_space<vmem>>, vector<16x512xf32>
      tpu.vector_store %arg10[%c0_11, %c0_12], %13 {strides = array<i32>} : memref<16x512xf32, #tpu.memory_space<vmem>>, vector<16x512xf32>,
    } else {
    }
    %c0 = arith.constant 0 : index
    %c0_1 = arith.constant 0 : index
    %3 = vector.load %arg2[%c0, %c0_1] : memref<16x1024xf32, #tpu.memory_space<vmem>>, vector<16x1024xf32>
    %4 = arith.truncf %3 : vector<16x1024xf32> to vector<16x1024xbf16>
    %c0_2 = arith.constant 0 : index
    %c0_3 = arith.constant 0 : index
    %5 = vector.load %arg10[%c0_2, %c0_3] : memref<16x512xf32, #tpu.memory_space<vmem>>, vector<16x512xf32>
    %c0_4 = arith.constant 0 : index
    %c0_5 = arith.constant 0 : index
    %6 = vector.load %arg3[%c0_4, %c0_5] : memref<1024x512xbf16, #tpu.memory_space<vmem>>, vector<1024x512xbf16>
    %cst = arith.constant dense<0.000000e+00> : vector<16x512xf32>
    %7 = tpu.matmul %4, %6, %cst {dimension_numbers = #tpu.dot_dimension_numbers<[1], [0], [0], [1], [0, 0, 1, 1], [], []>} : vector<16x1024xbf16>, vector<1024x512xbf16>, vector<16x512xf32> -> vector<16x512xf32>
    %8 = arith.addf %5, %7 : vector<16x512xf32>
    %c0_6 = arith.constant 0 : index
    %c0_7 = arith.constant 0 : index
    %9 = vector.load %arg10[%c0_6, %c0_7] : memref<16x512xf32, #tpu.memory_space<vmem>>, vector<16x512xf32>
    tpu.vector_store %arg10[%c0_6, %c0_7], %8 {strides = array<i32>} : memref<16x512xf32, #tpu.memory_space<vmem>>, vector<16x512xf32>,
    %c0_i32_8 = arith.constant 0 : i32
    %10 = arith.cmpi eq, %arg1, %c0_i32_8 : i32
    %11 = arith.extui %10 : i1 to i32
    %c0_i32_9 = arith.constant 0 : i32
    %12 = arith.cmpi ne, %11, %c0_i32_9 : i32
    scf.if %12 {
      %c0_10 = arith.constant 0 : index
      %c0_11 = arith.constant 0 : index
      %13 = vector.load %arg10[%c0_10, %c0_11] : memref<16x512xf32, #tpu.memory_space<vmem>>, vector<16x512xf32>
      %c0_12 = arith.constant 0 : index
      %c0_13 = arith.constant 0 : index
      %14 = vector.load %arg4[%c0_12, %c0_13] : memref<1x512xf32, #tpu.memory_space<vmem>>, vector<1x512xf32>
      %15 = vector.broadcast %14 : vector<1x512xf32> to vector<16x512xf32>
      %16 = arith.addf %13, %15 : vector<16x512xf32>
      %cst_14 = arith.constant 0.000000e+00 : f32
      %17 = vector.broadcast %cst_14 : f32 to vector<16x512xf32>
      %18 = arith.maximumf %16, %17 : vector<16x512xf32>
      %19 = arith.truncf %18 : vector<16x512xf32> to vector<16x512xbf16>
      %c0_15 = arith.constant 0 : index
      %c0_16 = arith.constant 0 : index
      %20 = vector.load %arg5[%c0_15, %c0_16] : memref<512x512xbf16, #tpu.memory_space<vmem>>, vector<512x512xbf16>
      %cst_17 = arith.constant dense<0.000000e+00> : vector<16x512xf32>
      %21 = tpu.matmul %19, %20, %cst_17 {dimension_numbers = #tpu.dot_dimension_numbers<[1], [0], [0], [1], [0, 0, 1, 1], [], []>} : vector<16x512xbf16>, vector<512x512xbf16>, vector<16x512xf32> -> vector<16x512xf32>
      %c0_18 = arith.constant 0 : index
      %c0_19 = arith.constant 0 : index
      %22 = vector.load %arg6[%c0_18, %c0_19] : memref<1x512xf32, #tpu.memory_space<vmem>>, vector<1x512xf32>
      %23 = vector.broadcast %22 : vector<1x512xf32> to vector<16x512xf32>
      %24 = arith.addf %21, %23 : vector<16x512xf32>
      %cst_20 = arith.constant 0.000000e+00 : f32
      %25 = vector.broadcast %cst_20 : f32 to vector<16x512xf32>
      %26 = arith.maximumf %24, %25 : vector<16x512xf32>
      %27 = arith.truncf %26 : vector<16x512xf32> to vector<16x512xbf16>
      %c0_21 = arith.constant 0 : index
      %c0_22 = arith.constant 0 : index
      %28 = vector.load %arg7[%c0_21, %c0_22] : memref<512x128xbf16, #tpu.memory_space<vmem>>, vector<512x128xbf16>
      %cst_23 = arith.constant dense<0.000000e+00> : vector<16x128xf32>
      %29 = tpu.matmul %27, %28, %cst_23 {dimension_numbers = #tpu.dot_dimension_numbers<[1], [0], [0], [1], [0, 0, 1, 1], [], []>} : vector<16x512xbf16>, vector<512x128xbf16>, vector<16x128xf32> -> vector<16x128xf32>
      %c0_24 = arith.constant 0 : index
      %c0_25 = arith.constant 0 : index
      %30 = vector.load %arg8[%c0_24, %c0_25] : memref<1x128xf32, #tpu.memory_space<vmem>>, vector<1x128xf32>
      %31 = vector.broadcast %30 : vector<1x128xf32> to vector<16x128xf32>
      %32 = arith.addf %29, %31 : vector<16x128xf32>
      %c0_26 = arith.constant 0 : index
      %c0_27 = arith.constant 0 : index
      %33 = vector.load %arg9[%c0_26, %c0_27] : memref<16x128xf32, #tpu.memory_space<vmem>>, vector<16x128xf32>
      tpu.vector_store %arg9[%c0_26, %c0_27], %32 {strides = array<i32>} : memref<16x128xf32, #tpu.memory_space<vmem>>, vector<16x128xf32>,
    } else {
    }
    return
  }
  func.func @transform_0(%arg0: i32, %arg1: i32) -> (i32, i32) {
    %c0_i32 = arith.constant 0 : i32
    return %arg0, %arg1 : i32, i32
  }
  func.func @transform_1(%arg0: i32, %arg1: i32) -> (i32, i32) {
    %c0_i32 = arith.constant 0 : i32
    %c0_i32_0 = arith.constant 0 : i32
    return %arg1, %c0_i32 : i32, i32
  }
  func.func @transform_2(%arg0: i32, %arg1: i32) -> (i32, i32) {
    %c0_i32 = arith.constant 0 : i32
    %c0_i32_0 = arith.constant 0 : i32
    %c0_i32_1 = arith.constant 0 : i32
    return %c0_i32, %c0_i32_0 : i32, i32
  }
  func.func @transform_3(%arg0: i32, %arg1: i32) -> (i32, i32) {
    %c0_i32 = arith.constant 0 : i32
    %c0_i32_0 = arith.constant 0 : i32
    %c0_i32_1 = arith.constant 0 : i32
    return %c0_i32, %c0_i32_0 : i32, i32
  }
  func.func @transform_4(%arg0: i32, %arg1: i32) -> (i32, i32) {
    %c0_i32 = arith.constant 0 : i32
    %c0_i32_0 = arith.constant 0 : i32
    %c0_i32_1 = arith.constant 0 : i32
    return %c0_i32, %c0_i32_0 : i32, i32
  }
  func.func @transform_5(%arg0: i32, %arg1: i32) -> (i32, i32) {
    %c0_i32 = arith.constant 0 : i32
    %c0_i32_0 = arith.constant 0 : i32
    %c0_i32_1 = arith.constant 0 : i32
    return %c0_i32, %c0_i32_0 : i32, i32
  }
  func.func @transform_6(%arg0: i32, %arg1: i32) -> (i32, i32) {
    %c0_i32 = arith.constant 0 : i32
    %c0_i32_0 = arith.constant 0 : i32
    %c0_i32_1 = arith.constant 0 : i32
    return %c0_i32, %c0_i32_0 : i32, i32
  }
  func.func @transform_7(%arg0: i32, %arg1: i32) -> (i32, i32) {
    %c0_i32 = arith.constant 0 : i32
    %c0_i32_0 = arith.constant 0 : i32
    return %arg0, %c0_i32 : i32, i32
  }
}

</mosaic_0001>

<llo_original>
// kernel: tpu_custom_call.1
$region0: #{tpu_custom_call.1}
  #allocation0 [shape = 'u32[]', space=smem, size = 0x4, offset = 0x4, fixed_abs, tag = 'smem constant byte address 0x4 - core index']
  #allocation1 [shape = 'u32[144,128]{1,0:T(1,128)}', space=vmem, size = 0x12000, scoped, tag = 'internal scratch']
  #allocation2 [shape = 'f32[16,512]{1,0:T(8,128)}', space=vmem, size = 0x8000, scoped, tag = 'scratch operand']
  %s0 = inlined_call_operand.hbm [shape: f32[16,1024], index: 0, kind: input, shape index: {}]
  %s1 = inlined_call_operand.hbm [shape: bf16[1024,512], index: 1, kind: input, shape index: {}]
  %s2 = inlined_call_operand.vmem [shape: f32[1,512], index: 2, kind: input, shape index: {}]
  %s3 = inlined_call_operand.hbm [shape: bf16[512,512], index: 3, kind: input, shape index: {}]
  %s4 = inlined_call_operand.vmem [shape: f32[1,512], index: 4, kind: input, shape index: {}]
  %s5 = inlined_call_operand.hbm [shape: bf16[512,128], index: 5, kind: input, shape index: {}]
  %s6 = inlined_call_operand.vmem [shape: f32[1,128], index: 6, kind: input, shape index: {}]
  %s7 = inlined_call_operand.hbm [shape: f32[16,128], index: 7, kind: output, shape index: {}]
  %s8 = sld [smem:[#allocation0]]
  $region62: #{tpu_custom_call.1} parent=0
    _
  %s10 = ssub.s32 1, %s8
  %s11 = scalar_select 0, %s10, %s8
  $region1: #{tpu_custom_call.1} parent=0
    #allocation3 [shape = 'u8[65536]{0}', space=vmem, size = 0x10000, scoped, tag = 'input window, operand 0, single buffered']
    #allocation4 [shape = 's32[1]{0}', space=sflag, size = 0x4, scoped, tag = 'scoped memory for tpu_custom_call.1']
    #allocation5 [shape = 's32[1]{0}', space=sflag, size = 0x4, scoped, tag = 'scoped memory for tpu_custom_call.1']
    #allocation6 [shape = 'u8[1048576]{0}', space=vmem, size = 0x100000, scoped, tag = 'input window, operand 1, single buffered']
    #allocation7 [shape = 's32[1]{0}', space=sflag, size = 0x4, scoped, tag = 'scoped memory for tpu_custom_call.1']
    #allocation8 [shape = 'u8[524288]{0}', space=vmem, size = 0x80000, scoped, tag = 'input window, operand 3, single buffered']
    #allocation9 [shape = 'u8[131072]{0}', space=vmem, size = 0x20000, scoped, tag = 'input window, operand 5, single buffered']
    #allocation10 [shape = 's32[1]{0}', space=sflag, size = 0x4, scoped, tag = 'scoped memory for tpu_custom_call.1']
    #allocation11 [shape = 'u8[8192]{0}', space=vmem, size = 0x2000, scoped, tag = 'output window, operand 0, single buffered']
    %12 = vsyncpa [#allocation4], 0
    %13 = vsyncpa [#allocation7], 0
    %14 = vsyncpa [#allocation10], 0
    %15 = vsyncpa [#allocation5], 0
    // Predicated region
    $region2: #{tpu_custom_call.1} parent=1 // pred_check
      _
    $region3: #{tpu_custom_call.1} parent=1 // pred_check_branch
      %17 = sbr.rel (0) target = $region5
    $region4: #{tpu_custom_call.1} parent=1 // pred_region
      %s19 = ssub.s32 2048, 2048
      %20 = vsyncadd [#allocation4], %s19
      %s21 = sshll.u32 [#allocation3], 4
      %s22 = int_to_ptr.vmem [resolvable:$true] %s21
      %27 = dma.hbm_to_vmem [thread:$0]  %s0, 2048, %s22, [#allocation4], 1024, 1024, 64
    $region5: #{tpu_custom_call.1} parent=1 // pred_fallthru
      _
    // Predicated region
    $region6: #{tpu_custom_call.1} parent=1 // pred_check
      _
    $region7: #{tpu_custom_call.1} parent=1 // pred_check_branch
      %29 = sbr.rel (0) target = $region9
    $region8: #{tpu_custom_call.1} parent=1 // pred_region
      %s31 = ssub.s32 32768, 32768
      %32 = vsyncadd [#allocation7], %s31
      %s33 = sshll.u32 [#allocation6], 4
      %s34 = int_to_ptr.vmem [resolvable:$true] %s33
      %39 = dma.hbm_to_vmem [thread:$0]  %s1, 32768, %s34, [#allocation7], 256, 256, 16
    $region9: #{tpu_custom_call.1} parent=1 // pred_fallthru
      _
    // Predicated region
    $region10: #{tpu_custom_call.1} parent=1 // pred_check
      _
    $region11: #{tpu_custom_call.1} parent=1 // pred_check_branch
      %41 = sbr.rel (0) target = $region13
    $region12: #{tpu_custom_call.1} parent=1 // pred_region
      _
    $region13: #{tpu_custom_call.1} parent=1 // pred_fallthru
      _
    // Predicated region
    $region14: #{tpu_custom_call.1} parent=1 // pred_check
      _
    $region15: #{tpu_custom_call.1} parent=1 // pred_check_branch
      %43 = sbr.rel (0) target = $region17
    $region16: #{tpu_custom_call.1} parent=1 // pred_region
      %s45 = ssub.s32 16384, 16384
      %46 = vsyncadd [#allocation7], %s45
      %s47 = sshll.u32 [#allocation8], 4
      %s48 = int_to_ptr.vmem [resolvable:$true] %s47
      %53 = dma.hbm_to_vmem [thread:$0]  %s3, 16384, %s48, [#allocation7], 256, 256, 16
    $region17: #{tpu_custom_call.1} parent=1 // pred_fallthru
      _
    // Predicated region
    $region18: #{tpu_custom_call.1} parent=1 // pred_check
      _
    $region19: #{tpu_custom_call.1} parent=1 // pred_check_branch
      %55 = sbr.rel (0) target = $region21
    $region20: #{tpu_custom_call.1} parent=1 // pred_region
      _
    $region21: #{tpu_custom_call.1} parent=1 // pred_fallthru
      _
    // Predicated region
    $region22: #{tpu_custom_call.1} parent=1 // pred_check
      _
    $region23: #{tpu_custom_call.1} parent=1 // pred_check_branch
      %57 = sbr.rel (0) target = $region25
    $region24: #{tpu_custom_call.1} parent=1 // pred_region
      %s59 = ssub.s32 4096, 4096
      %60 = vsyncadd [#allocation10], %s59
      %s61 = sshll.u32 [#allocation9], 4
      %s62 = int_to_ptr.vmem [resolvable:$true] %s61
      %67 = dma.hbm_to_vmem [thread:$0]  %s5, 4096, %s62, [#allocation10], 64, 64, 4
    $region25: #{tpu_custom_call.1} parent=1 // pred_fallthru
      _
    // Predicated region
    $region26: #{tpu_custom_call.1} parent=1 // pred_check
      _
    $region27: #{tpu_custom_call.1} parent=1 // pred_check_branch
      %69 = sbr.rel (0) target = $region29
    $region28: #{tpu_custom_call.1} parent=1 // pred_region
      _
    $region29: #{tpu_custom_call.1} parent=1 // pred_fallthru
      _
    // Predicated region
    $region30: #{tpu_custom_call.1} parent=1 // pred_check
      _
    $region31: #{tpu_custom_call.1} parent=1 // pred_check_branch
      %71 = sbr.rel (0) target = $region33
    $region32: #{tpu_custom_call.1} parent=1 // pred_region
      %72 = dma.done [#allocation4], 2048
    $region33: #{tpu_custom_call.1} parent=1 // pred_fallthru
      _
    // Predicated region
    $region34: #{tpu_custom_call.1} parent=1 // pred_check
      _
    $region35: #{tpu_custom_call.1} parent=1 // pred_check_branch
      %74 = sbr.rel (0) target = $region37
    $region36: #{tpu_custom_call.1} parent=1 // pred_region
      %75 = dma.done [#allocation7], 32768
    $region37: #{tpu_custom_call.1} parent=1 // pred_fallthru
      _
    // Predicated region
    $region38: #{tpu_custom_call.1} parent=1 // pred_check
      _
    $region39: #{tpu_custom_call.1} parent=1 // pred_check_branch
      %77 = sbr.rel (0) target = $region41
    $region40: #{tpu_custom_call.1} parent=1 // pred_region
      %78 = dma.done [#allocation7], 16384
    $region41: #{tpu_custom_call.1} parent=1 // pred_fallthru
      _
    // Predicated region
    $region42: #{tpu_custom_call.1} parent=1 // pred_check
      _
    $region43: #{tpu_custom_call.1} parent=1 // pred_check_branch
      %80 = sbr.rel (0) target = $region45
    $region44: #{tpu_custom_call.1} parent=1 // pred_region
      %81 = dma.done [#allocation10], 4096
    $region45: #{tpu_custom_call.1} parent=1 // pred_fallthru
      _
    %p83 = scmp.eq.s32.totalorder 0, 0
    // Predicated region
    $region46: #{tpu_custom_call.1} parent=1 // pred_check
      %p84 = pneg %p83
    $region47: #{tpu_custom_call.1} parent=1 // pred_check_branch
      %86 = sbr.rel (%p84) target = $region49
    $region48: #{tpu_custom_call.1} parent=1 // pred_region
      %87 = vst [vmem:[#allocation2] sm:$0xff] 0.0
      %88 = vst [vmem:[#allocation2 + $0x8] sm:$0xff] 0.0
      %89 = vst [vmem:[#allocation2 + $0x10] sm:$0xff] 0.0
      %90 = vst [vmem:[#allocation2 + $0x18] sm:$0xff] 0.0
      %91 = vst [vmem:[#allocation2 + $0x20] sm:$0xff] 0.0
      %92 = vst [vmem:[#allocation2 + $0x28] sm:$0xff] 0.0
      %93 = vst [vmem:[#allocation2 + $0x30] sm:$0xff] 0.0
      %94 = vst [vmem:[#allocation2 + $0x38] sm:$0xff] 0.0
    $region49: #{tpu_custom_call.1} parent=1 // pred_fallthru
      _
    %v95 = vld [vmem:[#allocation3] sm:$0xff]
    %v96 = vld [vmem:[#allocation3 + $0x8] sm:$0xff]
    %v97 = vld [vmem:[#allocation3 + $0x10] sm:$0xff]
    %v98 = vld [vmem:[#allocation3 + $0x18] sm:$0xff]
    %v99 = vld [vmem:[#allocation3 + $0x20] sm:$0xff]
    %v100 = vld [vmem:[#allocation3 + $0x28] sm:$0xff]
    %v101 = vld [vmem:[#allocation3 + $0x30] sm:$0xff]
    %v102 = vld [vmem:[#allocation3 + $0x38] sm:$0xff]
    %v103 = vld [vmem:[#allocation3 + $0x40] sm:$0xff]
    %v104 = vld [vmem:[#allocation3 + $0x48] sm:$0xff]
    %v105 = vld [vmem:[#allocation3 + $0x50] sm:$0xff]
    %v106 = vld [vmem:[#allocation3 + $0x58] sm:$0xff]
    %v107 = vld [vmem:[#allocation3 + $0x60] sm:$0xff]
    %v108 = vld [vmem:[#allocation3 + $0x68] sm:$0xff]
    %v109 = vld [vmem:[#allocation3 + $0x70] sm:$0xff]
    %v110 = vld [vmem:[#allocation3 + $0x78] sm:$0xff]
    %v111 = vpack.c.bf16 %v103, %v95
    %v112 = vpack.c.bf16 %v104, %v96
    %v113 = vpack.c.bf16 %v105, %v97
    %v114 = vpack.c.bf16 %v106, %v98
    %v115 = vpack.c.bf16 %v107, %v99
    %v116 = vpack.c.bf16 %v108, %v100
    %v117 = vpack.c.bf16 %v109, %v101
    %v118 = vpack.c.bf16 %v110, %v102
    %v119 = vld [vmem:[#allocation2] sm:$0xff]
    %v120 = vld [vmem:[#allocation2 + $0x8] sm:$0xff]
    %v121 = vld [vmem:[#allocation2 + $0x10] sm:$0xff]
    %v122 = vld [vmem:[#allocation2 + $0x18] sm:$0xff]
    %v123 = vld [vmem:[#allocation2 + $0x20] sm:$0xff]
    %v124 = vld [vmem:[#allocation2 + $0x28] sm:$0xff]
    %v125 = vld [vmem:[#allocation2 + $0x30] sm:$0xff]
    %v126 = vld [vmem:[#allocation2 + $0x38] sm:$0xff]
    %v127 = vld [vmem:[#allocation6] sm:$0xff]
    %v128 = vld [vmem:[#allocation6 + $0x8] sm:$0xff]
    %v129 = vld [vmem:[#allocation6 + $0x10] sm:$0xff]
    %v130 = vld [vmem:[#allocation6 + $0x18] sm:$0xff]
    %v131 = vld [vmem:[#allocation6 + $0x20] sm:$0xff]
    %v132 = vld [vmem:[#allocation6 + $0x28] sm:$0xff]
    %v133 = vld [vmem:[#allocation6 + $0x30] sm:$0xff]
    %v134 = vld [vmem:[#allocation6 + $0x38] sm:$0xff]
    %v135 = vld [vmem:[#allocation6 + $0x40] sm:$0xff]
    %v136 = vld [vmem:[#allocation6 + $0x48] sm:$0xff]
    %v137 = vld [vmem:[#allocation6 + $0x50] sm:$0xff]
    %v138 = vld [vmem:[#allocation6 + $0x58] sm:$0xff]
    %v139 = vld [vmem:[#allocation6 + $0x60] sm:$0xff]
    %v140 = vld [vmem:[#allocation6 + $0x68] sm:$0xff]
    %v141 = vld [vmem:[#allocation6 + $0x70] sm:$0xff]
    %v142 = vld [vmem:[#allocation6 + $0x78] sm:$0xff]
    %v143 = vld [vmem:[#allocation6 + $0x80] sm:$0xff]
    %v144 = vld [vmem:[#allocation6 + $0x88] sm:$0xff]
    %v145 = vld [vmem:[#allocation6 + $0x90] sm:$0xff]
    %v146 = vld [vmem:[#allocation6 + $0x98] sm:$0xff]
    %v147 = vld [vmem:[#allocation6 + $0xa0] sm:$0xff]
    %v148 = vld [vmem:[#allocation6 + $0xa8] sm:$0xff]
    %v149 = vld [vmem:[#allocation6 + $0xb0] sm:$0xff]
    %v150 = vld [vmem:[#allocation6 + $0xb8] sm:$0xff]
    %v151 = vld [vmem:[#allocation6 + $0xc0] sm:$0xff]
    %v152 = vld [vmem:[#allocation6 + $0xc8] sm:$0xff]
    %v153 = vld [vmem:[#allocation6 + $0xd0] sm:$0xff]
    %v154 = vld [vmem:[#allocation6 + $0xd8] sm:$0xff]
    %v155 = vld [vmem:[#allocation6 + $0xe0] sm:$0xff]
    %v156 = vld [vmem:[#allocation6 + $0xe8] sm:$0xff]
    %v157 = vld [vmem:[#allocation6 + $0xf0] sm:$0xff]
    %v158 = vld [vmem:[#allocation6 + $0xf8] sm:$0xff]
    %v159 = vld [vmem:[#allocation6 + $0x100] sm:$0xff]
    %v160 = vld [vmem:[#allocation6 + $0x108] sm:$0xff]
    %v161 = vld [vmem:[#allocation6 + $0x110] sm:$0xff]
    %v162 = vld [vmem:[#allocation6 + $0x118] sm:$0xff]
    %v163 = vld [vmem:[#allocation6 + $0x120] sm:$0xff]
    %v164 = vld [vmem:[#allocation6 + $0x128] sm:$0xff]
    %v165 = vld [vmem:[#allocation6 + $0x130] sm:$0xff]
    %v166 = vld [vmem:[#allocation6 + $0x138] sm:$0xff]
    %v167 = vld [vmem:[#allocation6 + $0x140] sm:$0xff]
    %v168 = vld [vmem:[#allocation6 + $0x148] sm:$0xff]
    %v169 = vld [vmem:[#allocation6 + $0x150] sm:$0xff]
    %v170 = vld [vmem:[#allocation6 + $0x158] sm:$0xff]
    %v171 = vld [vmem:[#allocation6 + $0x160] sm:$0xff]
    %v172 = vld [vmem:[#allocation6 + $0x168] sm:$0xff]
    %v173 = vld [vmem:[#allocation6 + $0x170] sm:$0xff]
    %v174 = vld [vmem:[#allocation6 + $0x178] sm:$0xff]
    %v175 = vld [vmem:[#allocation6 + $0x180] sm:$0xff]
    %v176 = vld [vmem:[#allocation6 + $0x188] sm:$0xff]
    %v177 = vld [vmem:[#allocation6 + $0x190] sm:$0xff]
    %v178 = vld [vmem:[#allocation6 + $0x198] sm:$0xff]
    %v179 = vld [vmem:[#allocation6 + $0x1a0] sm:$0xff]
    %v180 = vld [vmem:[#allocation6 + $0x1a8] sm:$0xff]
    %v181 = vld [vmem:[#allocation6 + $0x1b0] sm:$0xff]
    %v182 = vld [vmem:[#allocation6 + $0x1b8] sm:$0xff]
    %v183 = vld [vmem:[#allocation6 + $0x1c0] sm:$0xff]
    %v184 = vld [vmem:[#allocation6 + $0x1c8] sm:$0xff]
    %v185 = vld [vmem:[#allocation6 + $0x1d0] sm:$0xff]
    %v186 = vld [vmem:[#allocation6 + $0x1d8] sm:$0xff]
    %v187 = vld [vmem:[#allocation6 + $0x1e0] sm:$0xff]
    %v188 = vld [vmem:[#allocation6 + $0x1e8] sm:$0xff]
    %v189 = vld [vmem:[#allocation6 + $0x1f0] sm:$0xff]
    %v190 = vld [vmem:[#allocation6 + $0x1f8] sm:$0xff]
    %v191 = vld [vmem:[#allocation6 + $0x200] sm:$0xff]
    %v192 = vld [vmem:[#allocation6 + $0x208] sm:$0xff]
    %v193 = vld [vmem:[#allocation6 + $0x210] sm:$0xff]
    %v194 = vld [vmem:[#allocation6 + $0x218] sm:$0xff]
    %v195 = vld [vmem:[#allocation6 + $0x220] sm:$0xff]
    %v196 = vld [vmem:[#allocation6 + $0x228] sm:$0xff]
    %v197 = vld [vmem:[#allocation6 + $0x230] sm:$0xff]
    %v198 = vld [vmem:[#allocation6 + $0x238] sm:$0xff]
    %v199 = vld [vmem:[#allocation6 + $0x240] sm:$0xff]
    %v200 = vld [vmem:[#allocation6 + $0x248] sm:$0xff]
    %v201 = vld [vmem:[#allocation6 + $0x250] sm:$0xff]
    %v202 = vld [vmem:[#allocation6 + $0x258] sm:$0xff]
    %v203 = vld [vmem:[#allocation6 + $0x260] sm:$0xff]
    %v204 = vld [vmem:[#allocation6 + $0x268] sm:$0xff]
    %v205 = vld [vmem:[#allocation6 + $0x270] sm:$0xff]
    %v206 = vld [vmem:[#allocation6 + $0x278] sm:$0xff]
    %v207 = vld [vmem:[#allocation6 + $0x280] sm:$0xff]
    %v208 = vld [vmem:[#allocation6 + $0x288] sm:$0xff]
    %v209 = vld [vmem:[#allocation6 + $0x290] sm:$0xff]
    %v210 = vld [vmem:[#allocation6 + $0x298] sm:$0xff]
    %v211 = vld [vmem:[#allocation6 + $0x2a0] sm:$0xff]
    %v212 = vld [vmem:[#allocation6 + $0x2a8] sm:$0xff]
    %v213 = vld [vmem:[#allocation6 + $0x2b0] sm:$0xff]
    %v214 = vld [vmem:[#allocation6 + $0x2b8] sm:$0xff]
    %v215 = vld [vmem:[#allocation6 + $0x2c0] sm:$0xff]
    %v216 = vld [vmem:[#allocation6 + $0x2c8] sm:$0xff]
    %v217 = vld [vmem:[#allocation6 + $0x2d0] sm:$0xff]
    %v218 = vld [vmem:[#allocation6 + $0x2d8] sm:$0xff]
    %v219 = vld [vmem:[#allocation6 + $0x2e0] sm:$0xff]
    %v220 = vld [vmem:[#allocation6 + $0x2e8] sm:$0xff]
    %v221 = vld [vmem:[#allocation6 + $0x2f0] sm:$0xff]
    %v222 = vld [vmem:[#allocation6 + $0x2f8] sm:$0xff]
    %v223 = vld [vmem:[#allocation6 + $0x300] sm:$0xff]
    %v224 = vld [vmem:[#allocation6 + $0x308] sm:$0xff]
    %v225 = vld [vmem:[#allocation6 + $0x310] sm:$0xff]
    %v226 = vld [vmem:[#allocation6 + $0x318] sm:$0xff]
    %v227 = vld [vmem:[#allocation6 + $0x320] sm:$0xff]
    %v228 = vld [vmem:[#allocation6 + $0x328] sm:$0xff]
    %v229 = vld [vmem:[#allocation6 + $0x330] sm:$0xff]
    %v230 = vld [vmem:[#allocation6 + $0x338] sm:$0xff]
    %v231 = vld [vmem:[#allocation6 + $0x340] sm:$0xff]
    %v232 = vld [vmem:[#allocation6 + $0x348] sm:$0xff]
    %v233 = vld [vmem:[#allocation6 + $0x350] sm:$0xff]
    %v234 = vld [vmem:[#allocation6 + $0x358] sm:$0xff]
    %v235 = vld [vmem:[#allocation6 + $0x360] sm:$0xff]
    %v236 = vld [vmem:[#allocation6 + $0x368] sm:$0xff]
    %v237 = vld [vmem:[#allocation6 + $0x370] sm:$0xff]
    %v238 = vld [vmem:[#allocation6 + $0x378] sm:$0xff]
    %v239 = vld [vmem:[#allocation6 + $0x380] sm:$0xff]
    %v240 = vld [vmem:[#allocation6 + $0x388] sm:$0xff]
    %v241 = vld [vmem:[#allocation6 + $0x390] sm:$0xff]
    %v242 = vld [vmem:[#allocation6 + $0x398] sm:$0xff]
    %v243 = vld [vmem:[#allocation6 + $0x3a0] sm:$0xff]
    %v244 = vld [vmem:[#allocation6 + $0x3a8] sm:$0xff]
    %v245 = vld [vmem:[#allocation6 + $0x3b0] sm:$0xff]
    %v246 = vld [vmem:[#allocation6 + $0x3b8] sm:$0xff]
    %v247 = vld [vmem:[#allocation6 + $0x3c0] sm:$0xff]
    %v248 = vld [vmem:[#allocation6 + $0x3c8] sm:$0xff]
    %v249 = vld [vmem:[#allocation6 + $0x3d0] sm:$0xff]
    %v250 = vld [vmem:[#allocation6 + $0x3d8] sm:$0xff]
    %v251 = vld [vmem:[#allocation6 + $0x3e0] sm:$0xff]
    %v252 = vld [vmem:[#allocation6 + $0x3e8] sm:$0xff]
    %v253 = vld [vmem:[#allocation6 + $0x3f0] sm:$0xff]
    %v254 = vld [vmem:[#allocation6 + $0x3f8] sm:$0xff]
    %v255 = vld [vmem:[#allocation6 + $0x400] sm:$0xff]
    %v256 = vld [vmem:[#allocation6 + $0x408] sm:$0xff]
    %v257 = vld [vmem:[#allocation6 + $0x410] sm:$0xff]
    %v258 = vld [vmem:[#allocation6 + $0x418] sm:$0xff]
    %v259 = vld [vmem:[#allocation6 + $0x420] sm:$0xff]
    %v260 = vld [vmem:[#allocation6 + $0x428] sm:$0xff]
    %v261 = vld [vmem:[#allocation6 + $0x430] sm:$0xff]
    %v262 = vld [vmem:[#allocation6 + $0x438] sm:$0xff]
    %v263 = vld [vmem:[#allocation6 + $0x440] sm:$0xff]
    %v264 = vld [vmem:[#allocation6 + $0x448] sm:$0xff]
    %v265 = vld [vmem:[#allocation6 + $0x450] sm:$0xff]
    %v266 = vld [vmem:[#allocation6 + $0x458] sm:$0xff]
    %v267 = vld [vmem:[#allocation6 + $0x460] sm:$0xff]
    %v268 = vld [vmem:[#allocation6 + $0x468] sm:$0xff]
    %v269 = vld [vmem:[#allocation6 + $0x470] sm:$0xff]
    %v270 = vld [vmem:[#allocation6 + $0x478] sm:$0xff]
    %v271 = vld [vmem:[#allocation6 + $0x480] sm:$0xff]
    %v272 = vld [vmem:[#allocation6 + $0x488] sm:$0xff]
    %v273 = vld [vmem:[#allocation6 + $0x490] sm:$0xff]
    %v274 = vld [vmem:[#allocation6 + $0x498] sm:$0xff]
    %v275 = vld [vmem:[#allocation6 + $0x4a0] sm:$0xff]
    %v276 = vld [vmem:[#allocation6 + $0x4a8] sm:$0xff]
    %v277 = vld [vmem:[#allocation6 + $0x4b0] sm:$0xff]
    %v278 = vld [vmem:[#allocation6 + $0x4b8] sm:$0xff]
    %v279 = vld [vmem:[#allocation6 + $0x4c0] sm:$0xff]
    %v280 = vld [vmem:[#allocation6 + $0x4c8] sm:$0xff]
    %v281 = vld [vmem:[#allocation6 + $0x4d0] sm:$0xff]
    %v282 = vld [vmem:[#allocation6 + $0x4d8] sm:$0xff]
    %v283 = vld [vmem:[#allocation6 + $0x4e0] sm:$0xff]
    %v284 = vld [vmem:[#allocation6 + $0x4e8] sm:$0xff]
    %v285 = vld [vmem:[#allocation6 + $0x4f0] sm:$0xff]
    %v286 = vld [vmem:[#allocation6 + $0x4f8] sm:$0xff]
    %v287 = vld [vmem:[#allocation6 + $0x500] sm:$0xff]
    %v288 = vld [vmem:[#allocation6 + $0x508] sm:$0xff]
    %v289 = vld [vmem:[#allocation6 + $0x510] sm:$0xff]
    %v290 = vld [vmem:[#allocation6 + $0x518] sm:$0xff]
    %v291 = vld [vmem:[#allocation6 + $0x520] sm:$0xff]
    %v292 = vld [vmem:[#allocation6 + $0x528] sm:$0xff]
    %v293 = vld [vmem:[#allocation6 + $0x530] sm:$0xff]
    %v294 = vld [vmem:[#allocation6 + $0x538] sm:$0xff]
    %v295 = vld [vmem:[#allocation6 + $0x540] sm:$0xff]
    %v296 = vld [vmem:[#allocation6 + $0x548] sm:$0xff]
    %v297 = vld [vmem:[#allocation6 + $0x550] sm:$0xff]
    %v298 = vld [vmem:[#allocation6 + $0x558] sm:$0xff]
    %v299 = vld [vmem:[#allocation6 + $0x560] sm:$0xff]
    %v300 = vld [vmem:[#allocation6 + $0x568] sm:$0xff]
    %v301 = vld [vmem:[#allocation6 + $0x570] sm:$0xff]
    %v302 = vld [vmem:[#allocation6 + $0x578] sm:$0xff]
    %v303 = vld [vmem:[#allocation6 + $0x580] sm:$0xff]
    %v304 = vld [vmem:[#allocation6 + $0x588] sm:$0xff]
    %v305 = vld [vmem:[#allocation6 + $0x590] sm:$0xff]
    %v306 = vld [vmem:[#allocation6 + $0x598] sm:$0xff]
    %v307 = vld [vmem:[#allocation6 + $0x5a0] sm:$0xff]
    %v308 = vld [vmem:[#allocation6 + $0x5a8] sm:$0xff]
    %v309 = vld [vmem:[#allocation6 + $0x5b0] sm:$0xff]
    %v310 = vld [vmem:[#allocation6 + $0x5b8] sm:$0xff]
    %v311 = vld [vmem:[#allocation6 + $0x5c0] sm:$0xff]
    %v312 = vld [vmem:[#allocation6 + $0x5c8] sm:$0xff]
    %v313 = vld [vmem:[#allocation6 + $0x5d0] sm:$0xff]
    %v314 = vld [vmem:[#allocation6 + $0x5d8] sm:$0xff]
    %v315 = vld [vmem:[#allocation6 + $0x5e0] sm:$0xff]
    %v316 = vld [vmem:[#allocation6 + $0x5e8] sm:$0xff]
    %v317 = vld [vmem:[#allocation6 + $0x5f0] sm:$0xff]
    %v318 = vld [vmem:[#allocation6 + $0x5f8] sm:$0xff]
    %v319 = vld [vmem:[#allocation6 + $0x600] sm:$0xff]
    %v320 = vld [vmem:[#allocation6 + $0x608] sm:$0xff]
    %v321 = vld [vmem:[#allocation6 + $0x610] sm:$0xff]
    %v322 = vld [vmem:[#allocation6 + $0x618] sm:$0xff]
    %v323 = vld [vmem:[#allocation6 + $0x620] sm:$0xff]
    %v324 = vld [vmem:[#allocation6 + $0x628] sm:$0xff]
    %v325 = vld [vmem:[#allocation6 + $0x630] sm:$0xff]
    %v326 = vld [vmem:[#allocation6 + $0x638] sm:$0xff]
    %v327 = vld [vmem:[#allocation6 + $0x640] sm:$0xff]
    %v328 = vld [vmem:[#allocation6 + $0x648] sm:$0xff]
    %v329 = vld [vmem:[#allocation6 + $0x650] sm:$0xff]
    %v330 = vld [vmem:[#allocation6 + $0x658] sm:$0xff]
    %v331 = vld [vmem:[#allocation6 + $0x660] sm:$0xff]
    %v332 = vld [vmem:[#allocation6 + $0x668] sm:$0xff]
    %v333 = vld [vmem:[#allocation6 + $0x670] sm:$0xff]
    %v334 = vld [vmem:[#allocation6 + $0x678] sm:$0xff]
    %v335 = vld [vmem:[#allocation6 + $0x680] sm:$0xff]
    %v336 = vld [vmem:[#allocation6 + $0x688] sm:$0xff]
    %v337 = vld [vmem:[#allocation6 + $0x690] sm:$0xff]
    %v338 = vld [vmem:[#allocation6 + $0x698] sm:$0xff]
    %v339 = vld [vmem:[#allocation6 + $0x6a0] sm:$0xff]
    %v340 = vld [vmem:[#allocation6 + $0x6a8] sm:$0xff]
    %v341 = vld [vmem:[#allocation6 + $0x6b0] sm:$0xff]
    %v342 = vld [vmem:[#allocation6 + $0x6b8] sm:$0xff]
    %v343 = vld [vmem:[#allocation6 + $0x6c0] sm:$0xff]
    %v344 = vld [vmem:[#allocation6 + $0x6c8] sm:$0xff]
    %v345 = vld [vmem:[#allocation6 + $0x6d0] sm:$0xff]
    %v346 = vld [vmem:[#allocation6 + $0x6d8] sm:$0xff]
    %v347 = vld [vmem:[#allocation6 + $0x6e0] sm:$0xff]
    %v348 = vld [vmem:[#allocation6 + $0x6e8] sm:$0xff]
    %v349 = vld [vmem:[#allocation6 + $0x6f0] sm:$0xff]
    %v350 = vld [vmem:[#allocation6 + $0x6f8] sm:$0xff]
    %v351 = vld [vmem:[#allocation6 + $0x700] sm:$0xff]
    %v352 = vld [vmem:[#allocation6 + $0x708] sm:$0xff]
    %v353 = vld [vmem:[#allocation6 + $0x710] sm:$0xff]
    %v354 = vld [vmem:[#allocation6 + $0x718] sm:$0xff]
    %v355 = vld [vmem:[#allocation6 + $0x720] sm:$0xff]
    %v356 = vld [vmem:[#allocation6 + $0x728] sm:$0xff]
    %v357 = vld [vmem:[#allocation6 + $0x730] sm:$0xff]
    %v358 = vld [vmem:[#allocation6 + $0x738] sm:$0xff]
    %v359 = vld [vmem:[#allocation6 + $0x740] sm:$0xff]
    %v360 = vld [vmem:[#allocation6 + $0x748] sm:$0xff]
    %v361 = vld [vmem:[#allocation6 + $0x750] sm:$0xff]
    %v362 = vld [vmem:[#allocation6 + $0x758] sm:$0xff]
    %v363 = vld [vmem:[#allocation6 + $0x760] sm:$0xff]
    %v364 = vld [vmem:[#allocation6 + $0x768] sm:$0xff]
    %v365 = vld [vmem:[#allocation6 + $0x770] sm:$0xff]
    %v366 = vld [vmem:[#allocation6 + $0x778] sm:$0xff]
    %v367 = vld [vmem:[#allocation6 + $0x780] sm:$0xff]
    %v368 = vld [vmem:[#allocation6 + $0x788] sm:$0xff]
    %v369 = vld [vmem:[#allocation6 + $0x790] sm:$0xff]
    %v370 = vld [vmem:[#allocation6 + $0x798] sm:$0xff]
    %v371 = vld [vmem:[#allocation6 + $0x7a0] sm:$0xff]
    %v372 = vld [vmem:[#allocation6 + $0x7a8] sm:$0xff]
    %v373 = vld [vmem:[#allocation6 + $0x7b0] sm:$0xff]
    %v374 = vld [vmem:[#allocation6 + $0x7b8] sm:$0xff]
    %v375 = vld [vmem:[#allocation6 + $0x7c0] sm:$0xff]
    %v376 = vld [vmem:[#allocation6 + $0x7c8] sm:$0xff]
    %v377 = vld [vmem:[#allocation6 + $0x7d0] sm:$0xff]
    %v378 = vld [vmem:[#allocation6 + $0x7d8] sm:$0xff]
    %v379 = vld [vmem:[#allocation6 + $0x7e0] sm:$0xff]
    %v380 = vld [vmem:[#allocation6 + $0x7e8] sm:$0xff]
    %v381 = vld [vmem:[#allocation6 + $0x7f0] sm:$0xff]
    %v382 = vld [vmem:[#allocation6 + $0x7f8] sm:$0xff]
    %v639 = vunpack.c.l.b16 %v127
    %v640 = vunpack.c.h.b16 %v127
    %v641 = vunpack.c.l.b16 %v128
    %v642 = vunpack.c.h.b16 %v128
    %v643 = vunpack.c.l.b16 %v129
    %v644 = vunpack.c.h.b16 %v129
    %v645 = vunpack.c.l.b16 %v130
    %v646 = vunpack.c.h.b16 %v130
    %v647 = vunpack.c.l.b16 %v131
    %v648 = vunpack.c.h.b16 %v131
    %v649 = vunpack.c.l.b16 %v132
    %v650 = vunpack.c.h.b16 %v132
    %v651 = vunpack.c.l.b16 %v133
    %v652 = vunpack.c.h.b16 %v133
    %v653 = vunpack.c.l.b16 %v134
    %v654 = vunpack.c.h.b16 %v134
    %v655 = vunpack.c.l.b16 %v135
    %v656 = vunpack.c.h.b16 %v135
    %v657 = vunpack.c.l.b16 %v136
    %v658 = vunpack.c.h.b16 %v136
    %v659 = vunpack.c.l.b16 %v137
    %v660 = vunpack.c.h.b16 %v137
    %v661 = vunpack.c.l.b16 %v138
    %v662 = vunpack.c.h.b16 %v138
    %v663 = vunpack.c.l.b16 %v139
    %v664 = vunpack.c.h.b16 %v139
    %v665 = vunpack.c.l.b16 %v140
    %v666 = vunpack.c.h.b16 %v140
    %v667 = vunpack.c.l.b16 %v141
    %v668 = vunpack.c.h.b16 %v141
    %v669 = vunpack.c.l.b16 %v142
    %v670 = vunpack.c.h.b16 %v142
    %v671 = vunpack.c.l.b16 %v143
    %v672 = vunpack.c.h.b16 %v143
    %v673 = vunpack.c.l.b16 %v144
    %v674 = vunpack.c.h.b16 %v144
    %v675 = vunpack.c.l.b16 %v145
    %v676 = vunpack.c.h.b16 %v145
    %v677 = vunpack.c.l.b16 %v146
    %v678 = vunpack.c.h.b16 %v146
    %v679 = vunpack.c.l.b16 %v147
    %v680 = vunpack.c.h.b16 %v147
    %v681 = vunpack.c.l.b16 %v148
    %v682 = vunpack.c.h.b16 %v148
    %v683 = vunpack.c.l.b16 %v149
    %v684 = vunpack.c.h.b16 %v149
    %v685 = vunpack.c.l.b16 %v150
    %v686 = vunpack.c.h.b16 %v150
    %v687 = vunpack.c.l.b16 %v151
    %v688 = vunpack.c.h.b16 %v151
    %v689 = vunpack.c.l.b16 %v152
    %v690 = vunpack.c.h.b16 %v152
    %v691 = vunpack.c.l.b16 %v153
    %v692 = vunpack.c.h.b16 %v153
    %v693 = vunpack.c.l.b16 %v154
    %v694 = vunpack.c.h.b16 %v154
    %v695 = vunpack.c.l.b16 %v155
    %v696 = vunpack.c.h.b16 %v155
    %v697 = vunpack.c.l.b16 %v156
    %v698 = vunpack.c.h.b16 %v156
    %v699 = vunpack.c.l.b16 %v157
    %v700 = vunpack.c.h.b16 %v157
    %v701 = vunpack.c.l.b16 %v158
    %v702 = vunpack.c.h.b16 %v158
    %v703 = vunpack.c.l.b16 %v159
    %v704 = vunpack.c.h.b16 %v159
    %v705 = vunpack.c.l.b16 %v160
    %v706 = vunpack.c.h.b16 %v160
    %v707 = vunpack.c.l.b16 %v161
    %v708 = vunpack.c.h.b16 %v161
    %v709 = vunpack.c.l.b16 %v162
    %v710 = vunpack.c.h.b16 %v162
    %v711 = vunpack.c.l.b16 %v163
    %v712 = vunpack.c.h.b16 %v163
    %v713 = vunpack.c.l.b16 %v164
    %v714 = vunpack.c.h.b16 %v164
    %v715 = vunpack.c.l.b16 %v165
    %v716 = vunpack.c.h.b16 %v165
    %v717 = vunpack.c.l.b16 %v166
    %v718 = vunpack.c.h.b16 %v166
    %v719 = vunpack.c.l.b16 %v167
    %v720 = vunpack.c.h.b16 %v167
    %v721 = vunpack.c.l.b16 %v168
    %v722 = vunpack.c.h.b16 %v168
    %v723 = vunpack.c.l.b16 %v169
    %v724 = vunpack.c.h.b16 %v169
    %v725 = vunpack.c.l.b16 %v170
    %v726 = vunpack.c.h.b16 %v170
    %v727 = vunpack.c.l.b16 %v171
    %v728 = vunpack.c.h.b16 %v171
    %v729 = vunpack.c.l.b16 %v172
    %v730 = vunpack.c.h.b16 %v172
    %v731 = vunpack.c.l.b16 %v173
    %v732 = vunpack.c.h.b16 %v173
    %v733 = vunpack.c.l.b16 %v174
    %v734 = vunpack.c.h.b16 %v174
    %v735 = vunpack.c.l.b16 %v175
    %v736 = vunpack.c.h.b16 %v175
    %v737 = vunpack.c.l.b16 %v176
    %v738 = vunpack.c.h.b16 %v176
    %v739 = vunpack.c.l.b16 %v177
    %v740 = vunpack.c.h.b16 %v177
    %v741 = vunpack.c.l.b16 %v178
    %v742 = vunpack.c.h.b16 %v178
    %v743 = vunpack.c.l.b16 %v179
    %v744 = vunpack.c.h.b16 %v179
    %v745 = vunpack.c.l.b16 %v180
    %v746 = vunpack.c.h.b16 %v180
    %v747 = vunpack.c.l.b16 %v181
    %v748 = vunpack.c.h.b16 %v181
    %v749 = vunpack.c.l.b16 %v182
    %v750 = vunpack.c.h.b16 %v182
    %v751 = vunpack.c.l.b16 %v183
    %v752 = vunpack.c.h.b16 %v183
    %v753 = vunpack.c.l.b16 %v184
    %v754 = vunpack.c.h.b16 %v184
    %v755 = vunpack.c.l.b16 %v185
    %v756 = vunpack.c.h.b16 %v185
    %v757 = vunpack.c.l.b16 %v186
    %v758 = vunpack.c.h.b16 %v186
    %v759 = vunpack.c.l.b16 %v187
    %v760 = vunpack.c.h.b16 %v187
    %v761 = vunpack.c.l.b16 %v188
    %v762 = vunpack.c.h.b16 %v188
    %v763 = vunpack.c.l.b16 %v189
    %v764 = vunpack.c.h.b16 %v189
    %v765 = vunpack.c.l.b16 %v190
    %v766 = vunpack.c.h.b16 %v190
    %v767 = vunpack.c.l.b16 %v191
    %v768 = vunpack.c.h.b16 %v191
    %v769 = vunpack.c.l.b16 %v192
    %v770 = vunpack.c.h.b16 %v192
    %v771 = vunpack.c.l.b16 %v193
    %v772 = vunpack.c.h.b16 %v193
    %v773 = vunpack.c.l.b16 %v194
    %v774 = vunpack.c.h.b16 %v194
    %v775 = vunpack.c.l.b16 %v195
    %v776 = vunpack.c.h.b16 %v195
    %v777 = vunpack.c.l.b16 %v196
    %v778 = vunpack.c.h.b16 %v196
    %v779 = vunpack.c.l.b16 %v197
    %v780 = vunpack.c.h.b16 %v197
    %v781 = vunpack.c.l.b16 %v198
    %v782 = vunpack.c.h.b16 %v198
    %v783 = vunpack.c.l.b16 %v199
    %v784 = vunpack.c.h.b16 %v199
    %v785 = vunpack.c.l.b16 %v200
    %v786 = vunpack.c.h.b16 %v200
    %v787 = vunpack.c.l.b16 %v201
    %v788 = vunpack.c.h.b16 %v201
    %v789 = vunpack.c.l.b16 %v202
    %v790 = vunpack.c.h.b16 %v202
    %v791 = vunpack.c.l.b16 %v203
    %v792 = vunpack.c.h.b16 %v203
    %v793 = vunpack.c.l.b16 %v204
    %v794 = vunpack.c.h.b16 %v204
    %v795 = vunpack.c.l.b16 %v205
    %v796 = vunpack.c.h.b16 %v205
    %v797 = vunpack.c.l.b16 %v206
    %v798 = vunpack.c.h.b16 %v206
    %v799 = vunpack.c.l.b16 %v207
    %v800 = vunpack.c.h.b16 %v207
    %v801 = vunpack.c.l.b16 %v208
    %v802 = vunpack.c.h.b16 %v208
    %v803 = vunpack.c.l.b16 %v209
    %v804 = vunpack.c.h.b16 %v209
    %v805 = vunpack.c.l.b16 %v210
    %v806 = vunpack.c.h.b16 %v210
    %v807 = vunpack.c.l.b16 %v211
    %v808 = vunpack.c.h.b16 %v211
    %v809 = vunpack.c.l.b16 %v212
    %v810 = vunpack.c.h.b16 %v212
    %v811 = vunpack.c.l.b16 %v213
    %v812 = vunpack.c.h.b16 %v213
    %v813 = vunpack.c.l.b16 %v214
    %v814 = vunpack.c.h.b16 %v214
    %v815 = vunpack.c.l.b16 %v215
    %v816 = vunpack.c.h.b16 %v215
    %v817 = vunpack.c.l.b16 %v216
    %v818 = vunpack.c.h.b16 %v216
    %v819 = vunpack.c.l.b16 %v217
    %v820 = vunpack.c.h.b16 %v217
    %v821 = vunpack.c.l.b16 %v218
    %v822 = vunpack.c.h.b16 %v218
    %v823 = vunpack.c.l.b16 %v219
    %v824 = vunpack.c.h.b16 %v219
    %v825 = vunpack.c.l.b16 %v220
    %v826 = vunpack.c.h.b16 %v220
    %v827 = vunpack.c.l.b16 %v221
    %v828 = vunpack.c.h.b16 %v221
    %v829 = vunpack.c.l.b16 %v222
    %v830 = vunpack.c.h.b16 %v222
    %v831 = vunpack.c.l.b16 %v223
    %v832 = vunpack.c.h.b16 %v223
    %v833 = vunpack.c.l.b16 %v224
    %v834 = vunpack.c.h.b16 %v224
    %v835 = vunpack.c.l.b16 %v225
    %v836 = vunpack.c.h.b16 %v225
    %v837 = vunpack.c.l.b16 %v226
    %v838 = vunpack.c.h.b16 %v226
    %v839 = vunpack.c.l.b16 %v227
    %v840 = vunpack.c.h.b16 %v227
    %v841 = vunpack.c.l.b16 %v228
    %v842 = vunpack.c.h.b16 %v228
    %v843 = vunpack.c.l.b16 %v229
    %v844 = vunpack.c.h.b16 %v229
    %v845 = vunpack.c.l.b16 %v230
    %v846 = vunpack.c.h.b16 %v230
    %v847 = vunpack.c.l.b16 %v231
    %v848 = vunpack.c.h.b16 %v231
    %v849 = vunpack.c.l.b16 %v232
    %v850 = vunpack.c.h.b16 %v232
    %v851 = vunpack.c.l.b16 %v233
    %v852 = vunpack.c.h.b16 %v233
    %v853 = vunpack.c.l.b16 %v234
    %v854 = vunpack.c.h.b16 %v234
    %v855 = vunpack.c.l.b16 %v235
    %v856 = vunpack.c.h.b16 %v235
    %v857 = vunpack.c.l.b16 %v236
    %v858 = vunpack.c.h.b16 %v236
    %v859 = vunpack.c.l.b16 %v237
    %v860 = vunpack.c.h.b16 %v237
    %v861 = vunpack.c.l.b16 %v238
    %v862 = vunpack.c.h.b16 %v238
    %v863 = vunpack.c.l.b16 %v239
    %v864 = vunpack.c.h.b16 %v239
    %v865 = vunpack.c.l.b16 %v240
    %v866 = vunpack.c.h.b16 %v240
    %v867 = vunpack.c.l.b16 %v241
    %v868 = vunpack.c.h.b16 %v241
    %v869 = vunpack.c.l.b16 %v242
    %v870 = vunpack.c.h.b16 %v242
    %v871 = vunpack.c.l.b16 %v243
    %v872 = vunpack.c.h.b16 %v243
    %v873 = vunpack.c.l.b16 %v244
    %v874 = vunpack.c.h.b16 %v244
    %v875 = vunpack.c.l.b16 %v245
    %v876 = vunpack.c.h.b16 %v245
    %v877 = vunpack.c.l.b16 %v246
    %v878 = vunpack.c.h.b16 %v246
    %v879 = vunpack.c.l.b16 %v247
    %v880 = vunpack.c.h.b16 %v247
    %v881 = vunpack.c.l.b16 %v248
    %v882 = vunpack.c.h.b16 %v248
    %v883 = vunpack.c.l.b16 %v249
    %v884 = vunpack.c.h.b16 %v249
    %v885 = vunpack.c.l.b16 %v250
    %v886 = vunpack.c.h.b16 %v250
    %v887 = vunpack.c.l.b16 %v251
    %v888 = vunpack.c.h.b16 %v251
    %v889 = vunpack.c.l.b16 %v252
    %v890 = vunpack.c.h.b16 %v252
    %v891 = vunpack.c.l.b16 %v253
    %v892 = vunpack.c.h.b16 %v253
    %v893 = vunpack.c.l.b16 %v254
    %v894 = vunpack.c.h.b16 %v254
    %v895 = vunpack.c.l.b16 %v255
    %v896 = vunpack.c.h.b16 %v255
    %v897 = vunpack.c.l.b16 %v256
    %v898 = vunpack.c.h.b16 %v256
    %v899 = vunpack.c.l.b16 %v257
    %v900 = vunpack.c.h.b16 %v257
    %v901 = vunpack.c.l.b16 %v258
    %v902 = vunpack.c.h.b16 %v258
    %v903 = vunpack.c.l.b16 %v259
    %v904 = vunpack.c.h.b16 %v259
    %v905 = vunpack.c.l.b16 %v260
    %v906 = vunpack.c.h.b16 %v260
    %v907 = vunpack.c.l.b16 %v261
    %v908 = vunpack.c.h.b16 %v261
    %v909 = vunpack.c.l.b16 %v262
    %v910 = vunpack.c.h.b16 %v262
    %v911 = vunpack.c.l.b16 %v263
    %v912 = vunpack.c.h.b16 %v263
    %v913 = vunpack.c.l.b16 %v264
    %v914 = vunpack.c.h.b16 %v264
    %v915 = vunpack.c.l.b16 %v265
    %v916 = vunpack.c.h.b16 %v265
    %v917 = vunpack.c.l.b16 %v266
    %v918 = vunpack.c.h.b16 %v266
    %v919 = vunpack.c.l.b16 %v267
    %v920 = vunpack.c.h.b16 %v267
    %v921 = vunpack.c.l.b16 %v268
    %v922 = vunpack.c.h.b16 %v268
    %v923 = vunpack.c.l.b16 %v269
    %v924 = vunpack.c.h.b16 %v269
    %v925 = vunpack.c.l.b16 %v270
    %v926 = vunpack.c.h.b16 %v270
    %v927 = vunpack.c.l.b16 %v271
    %v928 = vunpack.c.h.b16 %v271
    %v929 = vunpack.c.l.b16 %v272
    %v930 = vunpack.c.h.b16 %v272
    %v931 = vunpack.c.l.b16 %v273
    %v932 = vunpack.c.h.b16 %v273
    %v933 = vunpack.c.l.b16 %v274
    %v934 = vunpack.c.h.b16 %v274
    %v935 = vunpack.c.l.b16 %v275
    %v936 = vunpack.c.h.b16 %v275
    %v937 = vunpack.c.l.b16 %v276
    %v938 = vunpack.c.h.b16 %v276
    %v939 = vunpack.c.l.b16 %v277
    %v940 = vunpack.c.h.b16 %v277
    %v941 = vunpack.c.l.b16 %v278
    %v942 = vunpack.c.h.b16 %v278
    %v943 = vunpack.c.l.b16 %v279
    %v944 = vunpack.c.h.b16 %v279
    %v945 = vunpack.c.l.b16 %v280
    %v946 = vunpack.c.h.b16 %v280
    %v947 = vunpack.c.l.b16 %v281
    %v948 = vunpack.c.h.b16 %v281
    %v949 = vunpack.c.l.b16 %v282
    %v950 = vunpack.c.h.b16 %v282
    %v951 = vunpack.c.l.b16 %v283
    %v952 = vunpack.c.h.b16 %v283
    %v953 = vunpack.c.l.b16 %v284
    %v954 = vunpack.c.h.b16 %v284
    %v955 = vunpack.c.l.b16 %v285
    %v956 = vunpack.c.h.b16 %v285
    %v957 = vunpack.c.l.b16 %v286
    %v958 = vunpack.c.h.b16 %v286
    %v959 = vunpack.c.l.b16 %v287
    %v960 = vunpack.c.h.b16 %v287
    %v961 = vunpack.c.l.b16 %v288
    %v962 = vunpack.c.h.b16 %v288
    %v963 = vunpack.c.l.b16 %v289
    %v964 = vunpack.c.h.b16 %v289
    %v965 = vunpack.c.l.b16 %v290
    %v966 = vunpack.c.h.b16 %v290
    %v967 = vunpack.c.l.b16 %v291
    %v968 = vunpack.c.h.b16 %v291
    %v969 = vunpack.c.l.b16 %v292
    %v970 = vunpack.c.h.b16 %v292
    %v971 = vunpack.c.l.b16 %v293
    %v972 = vunpack.c.h.b16 %v293
    %v973 = vunpack.c.l.b16 %v294
    %v974 = vunpack.c.h.b16 %v294
    %v975 = vunpack.c.l.b16 %v295
    %v976 = vunpack.c.h.b16 %v295
    %v977 = vunpack.c.l.b16 %v296
    %v978 = vunpack.c.h.b16 %v296
    %v979 = vunpack.c.l.b16 %v297
    %v980 = vunpack.c.h.b16 %v297
    %v981 = vunpack.c.l.b16 %v298
    %v982 = vunpack.c.h.b16 %v298
    %v983 = vunpack.c.l.b16 %v299
    %v984 = vunpack.c.h.b16 %v299
    %v985 = vunpack.c.l.b16 %v300
    %v986 = vunpack.c.h.b16 %v300
    %v987 = vunpack.c.l.b16 %v301
    %v988 = vunpack.c.h.b16 %v301
    %v989 = vunpack.c.l.b16 %v302
    %v990 = vunpack.c.h.b16 %v302
    %v991 = vunpack.c.l.b16 %v303
    %v992 = vunpack.c.h.b16 %v303
    %v993 = vunpack.c.l.b16 %v304
    %v994 = vunpack.c.h.b16 %v304
    %v995 = vunpack.c.l.b16 %v305
    %v996 = vunpack.c.h.b16 %v305
    %v997 = vunpack.c.l.b16 %v306
    %v998 = vunpack.c.h.b16 %v306
    %v999 = vunpack.c.l.b16 %v307
    %v1000 = vunpack.c.h.b16 %v307
    %v1001 = vunpack.c.l.b16 %v308
    %v1002 = vunpack.c.h.b16 %v308
    %v1003 = vunpack.c.l.b16 %v309
    %v1004 = vunpack.c.h.b16 %v309
    %v1005 = vunpack.c.l.b16 %v310
    %v1006 = vunpack.c.h.b16 %v310
    %v1007 = vunpack.c.l.b16 %v311
    %v1008 = vunpack.c.h.b16 %v311
    %v1009 = vunpack.c.l.b16 %v312
    %v1010 = vunpack.c.h.b16 %v312
    %v1011 = vunpack.c.l.b16 %v313
    %v1012 = vunpack.c.h.b16 %v313
    %v1013 = vunpack.c.l.b16 %v314
    %v1014 = vunpack.c.h.b16 %v314
    %v1015 = vunpack.c.l.b16 %v315
    %v1016 = vunpack.c.h.b16 %v315
    %v1017 = vunpack.c.l.b16 %v316
    %v1018 = vunpack.c.h.b16 %v316
    %v1019 = vunpack.c.l.b16 %v317
    %v1020 = vunpack.c.h.b16 %v317
    %v1021 = vunpack.c.l.b16 %v318
    %v1022 = vunpack.c.h.b16 %v318
    %v1023 = vunpack.c.l.b16 %v319
    %v1024 = vunpack.c.h.b16 %v319
    %v1025 = vunpack.c.l.b16 %v320
    %v1026 = vunpack.c.h.b16 %v320
    %v1027 = vunpack.c.l.b16 %v321
    %v1028 = vunpack.c.h.b16 %v321
    %v1029 = vunpack.c.l.b16 %v322
    %v1030 = vunpack.c.h.b16 %v322
    %v1031 = vunpack.c.l.b16 %v323
    %v1032 = vunpack.c.h.b16 %v323
    %v1033 = vunpack.c.l.b16 %v324
    %v1034 = vunpack.c.h.b16 %v324
    %v1035 = vunpack.c.l.b16 %v325
    %v1036 = vunpack.c.h.b16 %v325
    %v1037 = vunpack.c.l.b16 %v326
    %v1038 = vunpack.c.h.b16 %v326
    %v1039 = vunpack.c.l.b16 %v327
    %v1040 = vunpack.c.h.b16 %v327
    %v1041 = vunpack.c.l.b16 %v328
    %v1042 = vunpack.c.h.b16 %v328
    %v1043 = vunpack.c.l.b16 %v329
    %v1044 = vunpack.c.h.b16 %v329
    %v1045 = vunpack.c.l.b16 %v330
    %v1046 = vunpack.c.h.b16 %v330
    %v1047 = vunpack.c.l.b16 %v331
    %v1048 = vunpack.c.h.b16 %v331
    %v1049 = vunpack.c.l.b16 %v332
    %v1050 = vunpack.c.h.b16 %v332
    %v1051 = vunpack.c.l.b16 %v333
    %v1052 = vunpack.c.h.b16 %v333
    %v1053 = vunpack.c.l.b16 %v334
    %v1054 = vunpack.c.h.b16 %v334
    %v1055 = vunpack.c.l.b16 %v335
    %v1056 = vunpack.c.h.b16 %v335
    %v1057 = vunpack.c.l.b16 %v336
    %v1058 = vunpack.c.h.b16 %v336
    %v1059 = vunpack.c.l.b16 %v337
    %v1060 = vunpack.c.h.b16 %v337
    %v1061 = vunpack.c.l.b16 %v338
    %v1062 = vunpack.c.h.b16 %v338
    %v1063 = vunpack.c.l.b16 %v339
    %v1064 = vunpack.c.h.b16 %v339
    %v1065 = vunpack.c.l.b16 %v340
    %v1066 = vunpack.c.h.b16 %v340
    %v1067 = vunpack.c.l.b16 %v341
    %v1068 = vunpack.c.h.b16 %v341
    %v1069 = vunpack.c.l.b16 %v342
    %v1070 = vunpack.c.h.b16 %v342
    %v1071 = vunpack.c.l.b16 %v343
    %v1072 = vunpack.c.h.b16 %v343
    %v1073 = vunpack.c.l.b16 %v344
    %v1074 = vunpack.c.h.b16 %v344
    %v1075 = vunpack.c.l.b16 %v345
    %v1076 = vunpack.c.h.b16 %v345
    %v1077 = vunpack.c.l.b16 %v346
    %v1078 = vunpack.c.h.b16 %v346
    %v1079 = vunpack.c.l.b16 %v347
    %v1080 = vunpack.c.h.b16 %v347
    %v1081 = vunpack.c.l.b16 %v348
    %v1082 = vunpack.c.h.b16 %v348
    %v1083 = vunpack.c.l.b16 %v349
    %v1084 = vunpack.c.h.b16 %v349
    %v1085 = vunpack.c.l.b16 %v350
    %v1086 = vunpack.c.h.b16 %v350
    %v1087 = vunpack.c.l.b16 %v351
    %v1088 = vunpack.c.h.b16 %v351
    %v1089 = vunpack.c.l.b16 %v352
    %v1090 = vunpack.c.h.b16 %v352
    %v1091 = vunpack.c.l.b16 %v353
    %v1092 = vunpack.c.h.b16 %v353
    %v1093 = vunpack.c.l.b16 %v354
    %v1094 = vunpack.c.h.b16 %v354
    %v1095 = vunpack.c.l.b16 %v355
    %v1096 = vunpack.c.h.b16 %v355
    %v1097 = vunpack.c.l.b16 %v356
    %v1098 = vunpack.c.h.b16 %v356
    %v1099 = vunpack.c.l.b16 %v357
    %v1100 = vunpack.c.h.b16 %v357
    %v1101 = vunpack.c.l.b16 %v358
    %v1102 = vunpack.c.h.b16 %v358
    %v1103 = vunpack.c.l.b16 %v359
    %v1104 = vunpack.c.h.b16 %v359
    %v1105 = vunpack.c.l.b16 %v360
    %v1106 = vunpack.c.h.b16 %v360
    %v1107 = vunpack.c.l.b16 %v361
    %v1108 = vunpack.c.h.b16 %v361
    %v1109 = vunpack.c.l.b16 %v362
    %v1110 = vunpack.c.h.b16 %v362
    %v1111 = vunpack.c.l.b16 %v363
    %v1112 = vunpack.c.h.b16 %v363
    %v1113 = vunpack.c.l.b16 %v364
    %v1114 = vunpack.c.h.b16 %v364
    %v1115 = vunpack.c.l.b16 %v365
    %v1116 = vunpack.c.h.b16 %v365
    %v1117 = vunpack.c.l.b16 %v366
    %v1118 = vunpack.c.h.b16 %v366
    %v1119 = vunpack.c.l.b16 %v367
    %v1120 = vunpack.c.h.b16 %v367
    %v1121 = vunpack.c.l.b16 %v368
    %v1122 = vunpack.c.h.b16 %v368
    %v1123 = vunpack.c.l.b16 %v369
    %v1124 = vunpack.c.h.b16 %v369
    %v1125 = vunpack.c.l.b16 %v370
    %v1126 = vunpack.c.h.b16 %v370
    %v1127 = vunpack.c.l.b16 %v371
    %v1128 = vunpack.c.h.b16 %v371
    %v1129 = vunpack.c.l.b16 %v372
    %v1130 = vunpack.c.h.b16 %v372
    %v1131 = vunpack.c.l.b16 %v373
    %v1132 = vunpack.c.h.b16 %v373
    %v1133 = vunpack.c.l.b16 %v374
    %v1134 = vunpack.c.h.b16 %v374
    %v1135 = vunpack.c.l.b16 %v375
    %v1136 = vunpack.c.h.b16 %v375
    %v1137 = vunpack.c.l.b16 %v376
    %v1138 = vunpack.c.h.b16 %v376
    %v1139 = vunpack.c.l.b16 %v377
    %v1140 = vunpack.c.h.b16 %v377
    %v1141 = vunpack.c.l.b16 %v378
    %v1142 = vunpack.c.h.b16 %v378
    %v1143 = vunpack.c.l.b16 %v379
    %v1144 = vunpack.c.h.b16 %v379
    %v1145 = vunpack.c.l.b16 %v380
    %v1146 = vunpack.c.h.b16 %v380
    %v1147 = vunpack.c.l.b16 %v381
    %v1148 = vunpack.c.h.b16 %v381
    %v1149 = vunpack.c.l.b16 %v382
    %v1150 = vunpack.c.h.b16 %v382
    %v1151 = vpack.c.b16 %v643, %v639
    %v1152 = vpack.c.b16 %v644, %v640
    %v1153 = vpack.c.b16 %v645, %v641
    %v1154 = vpack.c.b16 %v646, %v642
    %v1155 = vpack.c.b16 %v651, %v647
    %v1156 = vpack.c.b16 %v652, %v648
    %v1157 = vpack.c.b16 %v653, %v649
    %v1158 = vpack.c.b16 %v654, %v650
    %v1159 = vpack.c.b16 %v659, %v655
    %v1160 = vpack.c.b16 %v660, %v656
    %v1161 = vpack.c.b16 %v661, %v657
    %v1162 = vpack.c.b16 %v662, %v658
    %v1163 = vpack.c.b16 %v667, %v663
    %v1164 = vpack.c.b16 %v668, %v664
    %v1165 = vpack.c.b16 %v669, %v665
    %v1166 = vpack.c.b16 %v670, %v666
    %v1167 = vpack.c.b16 %v675, %v671
    %v1168 = vpack.c.b16 %v676, %v672
    %v1169 = vpack.c.b16 %v677, %v673
    %v1170 = vpack.c.b16 %v678, %v674
    %v1171 = vpack.c.b16 %v683, %v679
    %v1172 = vpack.c.b16 %v684, %v680
    %v1173 = vpack.c.b16 %v685, %v681
    %v1174 = vpack.c.b16 %v686, %v682
    %v1175 = vpack.c.b16 %v691, %v687
    %v1176 = vpack.c.b16 %v692, %v688
    %v1177 = vpack.c.b16 %v693, %v689
    %v1178 = vpack.c.b16 %v694, %v690
    %v1179 = vpack.c.b16 %v699, %v695
    %v1180 = vpack.c.b16 %v700, %v696
    %v1181 = vpack.c.b16 %v701, %v697
    %v1182 = vpack.c.b16 %v702, %v698
    %v1183 = vpack.c.b16 %v707, %v703
    %v1184 = vpack.c.b16 %v708, %v704
    %v1185 = vpack.c.b16 %v709, %v705
    %v1186 = vpack.c.b16 %v710, %v706
    %v1187 = vpack.c.b16 %v715, %v711
    %v1188 = vpack.c.b16 %v716, %v712
    %v1189 = vpack.c.b16 %v717, %v713
    %v1190 = vpack.c.b16 %v718, %v714
    %v1191 = vpack.c.b16 %v723, %v719
    %v1192 = vpack.c.b16 %v724, %v720
    %v1193 = vpack.c.b16 %v725, %v721
    %v1194 = vpack.c.b16 %v726, %v722
    %v1195 = vpack.c.b16 %v731, %v727
    %v1196 = vpack.c.b16 %v732, %v728
    %v1197 = vpack.c.b16 %v733, %v729
    %v1198 = vpack.c.b16 %v734, %v730
    %v1199 = vpack.c.b16 %v739, %v735
    %v1200 = vpack.c.b16 %v740, %v736
    %v1201 = vpack.c.b16 %v741, %v737
    %v1202 = vpack.c.b16 %v742, %v738
    %v1203 = vpack.c.b16 %v747, %v743
    %v1204 = vpack.c.b16 %v748, %v744
    %v1205 = vpack.c.b16 %v749, %v745
    %v1206 = vpack.c.b16 %v750, %v746
    %v1207 = vpack.c.b16 %v755, %v751
    %v1208 = vpack.c.b16 %v756, %v752
    %v1209 = vpack.c.b16 %v757, %v753
    %v1210 = vpack.c.b16 %v758, %v754
    %v1211 = vpack.c.b16 %v763, %v759
    %v1212 = vpack.c.b16 %v764, %v760
    %v1213 = vpack.c.b16 %v765, %v761
    %v1214 = vpack.c.b16 %v766, %v762
    %v1215 = vpack.c.b16 %v771, %v767
    %v1216 = vpack.c.b16 %v772, %v768
    %v1217 = vpack.c.b16 %v773, %v769
    %v1218 = vpack.c.b16 %v774, %v770
    %v1219 = vpack.c.b16 %v779, %v775
    %v1220 = vpack.c.b16 %v780, %v776
    %v1221 = vpack.c.b16 %v781, %v777
    %v1222 = vpack.c.b16 %v782, %v778
    %v1223 = vpack.c.b16 %v787, %v783
    %v1224 = vpack.c.b16 %v788, %v784
    %v1225 = vpack.c.b16 %v789, %v785
    %v1226 = vpack.c.b16 %v790, %v786
    %v1227 = vpack.c.b16 %v795, %v791
    %v1228 = vpack.c.b16 %v796, %v792
    %v1229 = vpack.c.b16 %v797, %v793
    %v1230 = vpack.c.b16 %v798, %v794
    %v1231 = vpack.c.b16 %v803, %v799
    %v1232 = vpack.c.b16 %v804, %v800
    %v1233 = vpack.c.b16 %v805, %v801
    %v1234 = vpack.c.b16 %v806, %v802
    %v1235 = vpack.c.b16 %v811, %v807
    %v1236 = vpack.c.b16 %v812, %v808
    %v1237 = vpack.c.b16 %v813, %v809
    %v1238 = vpack.c.b16 %v814, %v810
    %v1239 = vpack.c.b16 %v819, %v815
    %v1240 = vpack.c.b16 %v820, %v816
    %v1241 = vpack.c.b16 %v821, %v817
    %v1242 = vpack.c.b16 %v822, %v818
    %v1243 = vpack.c.b16 %v827, %v823
    %v1244 = vpack.c.b16 %v828, %v824
    %v1245 = vpack.c.b16 %v829, %v825
    %v1246 = vpack.c.b16 %v830, %v826
    %v1247 = vpack.c.b16 %v835, %v831
    %v1248 = vpack.c.b16 %v836, %v832
    %v1249 = vpack.c.b16 %v837, %v833
    %v1250 = vpack.c.b16 %v838, %v834
    %v1251 = vpack.c.b16 %v843, %v839
    %v1252 = vpack.c.b16 %v844, %v840
    %v1253 = vpack.c.b16 %v845, %v841
    %v1254 = vpack.c.b16 %v846, %v842
    %v1255 = vpack.c.b16 %v851, %v847
    %v1256 = vpack.c.b16 %v852, %v848
    %v1257 = vpack.c.b16 %v853, %v849
    %v1258 = vpack.c.b16 %v854, %v850
    %v1259 = vpack.c.b16 %v859, %v855
    %v1260 = vpack.c.b16 %v860, %v856
    %v1261 = vpack.c.b16 %v861, %v857
    %v1262 = vpack.c.b16 %v862, %v858
    %v1263 = vpack.c.b16 %v867, %v863
    %v1264 = vpack.c.b16 %v868, %v864
    %v1265 = vpack.c.b16 %v869, %v865
    %v1266 = vpack.c.b16 %v870, %v866
    %v1267 = vpack.c.b16 %v875, %v871
    %v1268 = vpack.c.b16 %v876, %v872
    %v1269 = vpack.c.b16 %v877, %v873
    %v1270 = vpack.c.b16 %v878, %v874
    %v1271 = vpack.c.b16 %v883, %v879
    %v1272 = vpack.c.b16 %v884, %v880
    %v1273 = vpack.c.b16 %v885, %v881
    %v1274 = vpack.c.b16 %v886, %v882
    %v1275 = vpack.c.b16 %v891, %v887
    %v1276 = vpack.c.b16 %v892, %v888
    %v1277 = vpack.c.b16 %v893, %v889
    %v1278 = vpack.c.b16 %v894, %v890
    %v1279 = vpack.c.b16 %v899, %v895
    %v1280 = vpack.c.b16 %v900, %v896
    %v1281 = vpack.c.b16 %v901, %v897
    %v1282 = vpack.c.b16 %v902, %v898
    %v1283 = vpack.c.b16 %v907, %v903
    %v1284 = vpack.c.b16 %v908, %v904
    %v1285 = vpack.c.b16 %v909, %v905
    %v1286 = vpack.c.b16 %v910, %v906
    %v1287 = vpack.c.b16 %v915, %v911
    %v1288 = vpack.c.b16 %v916, %v912
    %v1289 = vpack.c.b16 %v917, %v913
    %v1290 = vpack.c.b16 %v918, %v914
    %v1291 = vpack.c.b16 %v923, %v919
    %v1292 = vpack.c.b16 %v924, %v920
    %v1293 = vpack.c.b16 %v925, %v921
    %v1294 = vpack.c.b16 %v926, %v922
    %v1295 = vpack.c.b16 %v931, %v927
    %v1296 = vpack.c.b16 %v932, %v928
    %v1297 = vpack.c.b16 %v933, %v929
    %v1298 = vpack.c.b16 %v934, %v930
    %v1299 = vpack.c.b16 %v939, %v935
    %v1300 = vpack.c.b16 %v940, %v936
    %v1301 = vpack.c.b16 %v941, %v937
    %v1302 = vpack.c.b16 %v942, %v938
    %v1303 = vpack.c.b16 %v947, %v943
    %v1304 = vpack.c.b16 %v948, %v944
    %v1305 = vpack.c.b16 %v949, %v945
    %v1306 = vpack.c.b16 %v950, %v946
    %v1307 = vpack.c.b16 %v955, %v951
    %v1308 = vpack.c.b16 %v956, %v952
    %v1309 = vpack.c.b16 %v957, %v953
    %v1310 = vpack.c.b16 %v958, %v954
    %v1311 = vpack.c.b16 %v963, %v959
    %v1312 = vpack.c.b16 %v964, %v960
    %v1313 = vpack.c.b16 %v965, %v961
    %v1314 = vpack.c.b16 %v966, %v962
    %v1315 = vpack.c.b16 %v971, %v967
    %v1316 = vpack.c.b16 %v972, %v968
    %v1317 = vpack.c.b16 %v973, %v969
    %v1318 = vpack.c.b16 %v974, %v970
    %v1319 = vpack.c.b16 %v979, %v975
    %v1320 = vpack.c.b16 %v980, %v976
    %v1321 = vpack.c.b16 %v981, %v977
    %v1322 = vpack.c.b16 %v982, %v978
    %v1323 = vpack.c.b16 %v987, %v983
    %v1324 = vpack.c.b16 %v988, %v984
    %v1325 = vpack.c.b16 %v989, %v985
    %v1326 = vpack.c.b16 %v990, %v986
    %v1327 = vpack.c.b16 %v995, %v991
    %v1328 = vpack.c.b16 %v996, %v992
    %v1329 = vpack.c.b16 %v997, %v993
    %v1330 = vpack.c.b16 %v998, %v994
    %v1331 = vpack.c.b16 %v1003, %v999
    %v1332 = vpack.c.b16 %v1004, %v1000
    %v1333 = vpack.c.b16 %v1005, %v1001
    %v1334 = vpack.c.b16 %v1006, %v1002
    %v1335 = vpack.c.b16 %v1011, %v1007
    %v1336 = vpack.c.b16 %v1012, %v1008
    %v1337 = vpack.c.b16 %v1013, %v1009
    %v1338 = vpack.c.b16 %v1014, %v1010
    %v1339 = vpack.c.b16 %v1019, %v1015
    %v1340 = vpack.c.b16 %v1020, %v1016
    %v1341 = vpack.c.b16 %v1021, %v1017
    %v1342 = vpack.c.b16 %v1022, %v1018
    %v1343 = vpack.c.b16 %v1027, %v1023
    %v1344 = vpack.c.b16 %v1028, %v1024
    %v1345 = vpack.c.b16 %v1029, %v1025
    %v1346 = vpack.c.b16 %v1030, %v1026
    %v1347 = vpack.c.b16 %v1035, %v1031
    %v1348 = vpack.c.b16 %v1036, %v1032
    %v1349 = vpack.c.b16 %v1037, %v1033
    %v1350 = vpack.c.b16 %v1038, %v1034
    %v1351 = vpack.c.b16 %v1043, %v1039
    %v1352 = vpack.c.b16 %v1044, %v1040
    %v1353 = vpack.c.b16 %v1045, %v1041
    %v1354 = vpack.c.b16 %v1046, %v1042
    %v1355 = vpack.c.b16 %v1051, %v1047
    %v1356 = vpack.c.b16 %v1052, %v1048
    %v1357 = vpack.c.b16 %v1053, %v1049
    %v1358 = vpack.c.b16 %v1054, %v1050
    %v1359 = vpack.c.b16 %v1059, %v1055
    %v1360 = vpack.c.b16 %v1060, %v1056
    %v1361 = vpack.c.b16 %v1061, %v1057
    %v1362 = vpack.c.b16 %v1062, %v1058
    %v1363 = vpack.c.b16 %v1067, %v1063
    %v1364 = vpack.c.b16 %v1068, %v1064
    %v1365 = vpack.c.b16 %v1069, %v1065
    %v1366 = vpack.c.b16 %v1070, %v1066
    %v1367 = vpack.c.b16 %v1075, %v1071
    %v1368 = vpack.c.b16 %v1076, %v1072
    %v1369 = vpack.c.b16 %v1077, %v1073
    %v1370 = vpack.c.b16 %v1078, %v1074
    %v1371 = vpack.c.b16 %v1083, %v1079
    %v1372 = vpack.c.b16 %v1084, %v1080
    %v1373 = vpack.c.b16 %v1085, %v1081
    %v1374 = vpack.c.b16 %v1086, %v1082
    %v1375 = vpack.c.b16 %v1091, %v1087
    %v1376 = vpack.c.b16 %v1092, %v1088
    %v1377 = vpack.c.b16 %v1093, %v1089
    %v1378 = vpack.c.b16 %v1094, %v1090
    %v1379 = vpack.c.b16 %v1099, %v1095
    %v1380 = vpack.c.b16 %v1100, %v1096
    %v1381 = vpack.c.b16 %v1101, %v1097
    %v1382 = vpack.c.b16 %v1102, %v1098
    %v1383 = vpack.c.b16 %v1107, %v1103
    %v1384 = vpack.c.b16 %v1108, %v1104
    %v1385 = vpack.c.b16 %v1109, %v1105
    %v1386 = vpack.c.b16 %v1110, %v1106
    %v1387 = vpack.c.b16 %v1115, %v1111
    %v1388 = vpack.c.b16 %v1116, %v1112
    %v1389 = vpack.c.b16 %v1117, %v1113
    %v1390 = vpack.c.b16 %v1118, %v1114
    %v1391 = vpack.c.b16 %v1123, %v1119
    %v1392 = vpack.c.b16 %v1124, %v1120
    %v1393 = vpack.c.b16 %v1125, %v1121
    %v1394 = vpack.c.b16 %v1126, %v1122
    %v1395 = vpack.c.b16 %v1131, %v1127
    %v1396 = vpack.c.b16 %v1132, %v1128
    %v1397 = vpack.c.b16 %v1133, %v1129
    %v1398 = vpack.c.b16 %v1134, %v1130
    %v1399 = vpack.c.b16 %v1139, %v1135
    %v1400 = vpack.c.b16 %v1140, %v1136
    %v1401 = vpack.c.b16 %v1141, %v1137
    %v1402 = vpack.c.b16 %v1142, %v1138
    %v1403 = vpack.c.b16 %v1147, %v1143
    %v1404 = vpack.c.b16 %v1148, %v1144
    %v1405 = vpack.c.b16 %v1149, %v1145
    %v1406 = vpack.c.b16 %v1150, %v1146
    %1663 = vmatprep.subr.bf16.mxu0 %v1152
    %1664 = vmatpush1.bf16.msra.mxu0 %v1151
    %1665 = vmatprep.subr.bf16.mxu0 %v1156
    %1666 = vmatpush1.bf16.msra.mxu0 %v1155
    %1667 = vmatprep.subr.bf16.mxu0 %v1160
    %1668 = vmatpush1.bf16.msra.mxu0 %v1159
    %1669 = vmatprep.subr.bf16.mxu0 %v1164
    %1670 = vmatpush1.bf16.msra.mxu0 %v1163
    %1671 = vmatprep.subr.bf16.mxu0 %v1168
    %1672 = vmatpush1.bf16.msra.mxu0 %v1167
    %1673 = vmatprep.subr.bf16.mxu0 %v1172
    %1674 = vmatpush1.bf16.msra.mxu0 %v1171
    %1675 = vmatprep.subr.bf16.mxu0 %v1176
    %1676 = vmatpush1.bf16.msra.mxu0 %v1175
    %1677 = vmatprep.subr.bf16.mxu0 %v1180
    %1678 = vmatpush1.bf16.msra.mxu0 %v1179
    %1679 = vmatprep.subr.bf16.mxu0 %v1184
    %1680 = vmatpush1.bf16.msra.mxu0 %v1183
    %1681 = vmatprep.subr.bf16.mxu0 %v1188
    %1682 = vmatpush1.bf16.msra.mxu0 %v1187
    %1683 = vmatprep.subr.bf16.mxu0 %v1192
    %1684 = vmatpush1.bf16.msra.mxu0 %v1191
    %1685 = vmatprep.subr.bf16.mxu0 %v1196
    %1686 = vmatpush1.bf16.msra.mxu0 %v1195
    %1687 = vmatprep.subr.bf16.mxu0 %v1200
    %1688 = vmatpush1.bf16.msra.mxu0 %v1199
    %1689 = vmatprep.subr.bf16.mxu0 %v1204
    %1690 = vmatpush1.bf16.msra.mxu0 %v1203
    %1691 = vmatprep.subr.bf16.mxu0 %v1208
    %1692 = vmatpush1.bf16.msra.mxu0 %v1207
    %1693 = vmatprep.subr.bf16.mxu0 %v1212
    %1694 = vmatpush1.bf16.msra.mxu0 %v1211
    %1695 = vmatprep.mubr.bf16.mxu0 %v112
    %1696 = vmatmul.mubr.bf16.gmra.mrb[0].mxu0 %v111
    %v1697 = vpop.f32.mrb[0].mxu0
    %v1698 = vadd.f32 0.0, %v1697
    %v1699 = vpop.f32.mrb[0].mxu0
    %v1700 = vadd.f32 0.0, %v1699
    %v1701 = vpop.f32.mrb[0].mxu0
    %v1702 = vadd.f32 0.0, %v1701
    %v1703 = vpop.f32.mrb[0].mxu0
    %v1704 = vadd.f32 0.0, %v1703
    %1705 = vdwg.mxu0
    %1706 = vmatprep.subr.bf16.mxu0 %v1216
    %1707 = vmatpush1.bf16.msra.mxu0 %v1215
    %1708 = vmatprep.subr.bf16.mxu0 %v1220
    %1709 = vmatpush1.bf16.msra.mxu0 %v1219
    %1710 = vmatprep.subr.bf16.mxu0 %v1224
    %1711 = vmatpush1.bf16.msra.mxu0 %v1223
    %1712 = vmatprep.subr.bf16.mxu0 %v1228
    %1713 = vmatpush1.bf16.msra.mxu0 %v1227
    %1714 = vmatprep.subr.bf16.mxu0 %v1232
    %1715 = vmatpush1.bf16.msra.mxu0 %v1231
    %1716 = vmatprep.subr.bf16.mxu0 %v1236
    %1717 = vmatpush1.bf16.msra.mxu0 %v1235
    %1718 = vmatprep.subr.bf16.mxu0 %v1240
    %1719 = vmatpush1.bf16.msra.mxu0 %v1239
    %1720 = vmatprep.subr.bf16.mxu0 %v1244
    %1721 = vmatpush1.bf16.msra.mxu0 %v1243
    %1722 = vmatprep.subr.bf16.mxu0 %v1248
    %1723 = vmatpush1.bf16.msra.mxu0 %v1247
    %1724 = vmatprep.subr.bf16.mxu0 %v1252
    %1725 = vmatpush1.bf16.msra.mxu0 %v1251
    %1726 = vmatprep.subr.bf16.mxu0 %v1256
    %1727 = vmatpush1.bf16.msra.mxu0 %v1255
    %1728 = vmatprep.subr.bf16.mxu0 %v1260
    %1729 = vmatpush1.bf16.msra.mxu0 %v1259
    %1730 = vmatprep.subr.bf16.mxu0 %v1264
    %1731 = vmatpush1.bf16.msra.mxu0 %v1263
    %1732 = vmatprep.subr.bf16.mxu0 %v1268
    %1733 = vmatpush1.bf16.msra.mxu0 %v1267
    %1734 = vmatprep.subr.bf16.mxu0 %v1272
    %1735 = vmatpush1.bf16.msra.mxu0 %v1271
    %1736 = vmatprep.subr.bf16.mxu0 %v1276
    %1737 = vmatpush1.bf16.msra.mxu0 %v1275
    %1738 = vmatprep.mubr.bf16.mxu0 %v114
    %1739 = vmatmul.mubr.bf16.gmra.mrb[0].mxu0 %v113
    %v1740 = vpop.f32.mrb[0].mxu0
    %v1741 = vadd.f32 %v1698, %v1740
    %v1742 = vpop.f32.mrb[0].mxu0
    %v1743 = vadd.f32 %v1700, %v1742
    %v1744 = vpop.f32.mrb[0].mxu0
    %v1745 = vadd.f32 %v1702, %v1744
    %v1746 = vpop.f32.mrb[0].mxu0
    %v1747 = vadd.f32 %v1704, %v1746
    %1748 = vdwg.mxu0
    %1749 = vmatprep.subr.bf16.mxu0 %v1280
    %1750 = vmatpush1.bf16.msra.mxu0 %v1279
    %1751 = vmatprep.subr.bf16.mxu0 %v1284
    %1752 = vmatpush1.bf16.msra.mxu0 %v1283
    %1753 = vmatprep.subr.bf16.mxu0 %v1288
    %1754 = vmatpush1.bf16.msra.mxu0 %v1287
    %1755 = vmatprep.subr.bf16.mxu0 %v1292
    %1756 = vmatpush1.bf16.msra.mxu0 %v1291
    %1757 = vmatprep.subr.bf16.mxu0 %v1296
    %1758 = vmatpush1.bf16.msra.mxu0 %v1295
    %1759 = vmatprep.subr.bf16.mxu0 %v1300
    %1760 = vmatpush1.bf16.msra.mxu0 %v1299
    %1761 = vmatprep.subr.bf16.mxu0 %v1304
    %1762 = vmatpush1.bf16.msra.mxu0 %v1303
    %1763 = vmatprep.subr.bf16.mxu0 %v1308
    %1764 = vmatpush1.bf16.msra.mxu0 %v1307
    %1765 = vmatprep.subr.bf16.mxu0 %v1312
    %1766 = vmatpush1.bf16.msra.mxu0 %v1311
    %1767 = vmatprep.subr.bf16.mxu0 %v1316
    %1768 = vmatpush1.bf16.msra.mxu0 %v1315
    %1769 = vmatprep.subr.bf16.mxu0 %v1320
    %1770 = vmatpush1.bf16.msra.mxu0 %v1319
    %1771 = vmatprep.subr.bf16.mxu0 %v1324
    %1772 = vmatpush1.bf16.msra.mxu0 %v1323
    %1773 = vmatprep.subr.bf16.mxu0 %v1328
    %1774 = vmatpush1.bf16.msra.mxu0 %v1327
    %1775 = vmatprep.subr.bf16.mxu0 %v1332
    %1776 = vmatpush1.bf16.msra.mxu0 %v1331
    %1777 = vmatprep.subr.bf16.mxu0 %v1336
    %1778 = vmatpush1.bf16.msra.mxu0 %v1335
    %1779 = vmatprep.subr.bf16.mxu0 %v1340
    %1780 = vmatpush1.bf16.msra.mxu0 %v1339
    %1781 = vmatprep.mubr.bf16.mxu0 %v116
    %1782 = vmatmul.mubr.bf16.gmra.mrb[0].mxu0 %v115
    %v1783 = vpop.f32.mrb[0].mxu0
    %v1784 = vadd.f32 %v1741, %v1783
    %v1785 = vpop.f32.mrb[0].mxu0
    %v1786 = vadd.f32 %v1743, %v1785
    %v1787 = vpop.f32.mrb[0].mxu0
    %v1788 = vadd.f32 %v1745, %v1787
    %v1789 = vpop.f32.mrb[0].mxu0
    %v1790 = vadd.f32 %v1747, %v1789
    %1791 = vdwg.mxu0
    %1792 = vmatprep.subr.bf16.mxu0 %v1344
    %1793 = vmatpush1.bf16.msra.mxu0 %v1343
    %1794 = vmatprep.subr.bf16.mxu0 %v1348
    %1795 = vmatpush1.bf16.msra.mxu0 %v1347
    %1796 = vmatprep.subr.bf16.mxu0 %v1352
    %1797 = vmatpush1.bf16.msra.mxu0 %v1351
    %1798 = vmatprep.subr.bf16.mxu0 %v1356
    %1799 = vmatpush1.bf16.msra.mxu0 %v1355
    %1800 = vmatprep.subr.bf16.mxu0 %v1360
    %1801 = vmatpush1.bf16.msra.mxu0 %v1359
    %1802 = vmatprep.subr.bf16.mxu0 %v1364
    %1803 = vmatpush1.bf16.msra.mxu0 %v1363
    %1804 = vmatprep.subr.bf16.mxu0 %v1368
    %1805 = vmatpush1.bf16.msra.mxu0 %v1367
    %1806 = vmatprep.subr.bf16.mxu0 %v1372
    %1807 = vmatpush1.bf16.msra.mxu0 %v1371
    %1808 = vmatprep.subr.bf16.mxu0 %v1376
    %1809 = vmatpush1.bf16.msra.mxu0 %v1375
    %1810 = vmatprep.subr.bf16.mxu0 %v1380
    %1811 = vmatpush1.bf16.msra.mxu0 %v1379
    %1812 = vmatprep.subr.bf16.mxu0 %v1384
    %1813 = vmatpush1.bf16.msra.mxu0 %v1383
    %1814 = vmatprep.subr.bf16.mxu0 %v1388
    %1815 = vmatpush1.bf16.msra.mxu0 %v1387
    %1816 = vmatprep.subr.bf16.mxu0 %v1392
    %1817 = vmatpush1.bf16.msra.mxu0 %v1391
    %1818 = vmatprep.subr.bf16.mxu0 %v1396
    %1819 = vmatpush1.bf16.msra.mxu0 %v1395
    %1820 = vmatprep.subr.bf16.mxu0 %v1400
    %1821 = vmatpush1.bf16.msra.mxu0 %v1399
    %1822 = vmatprep.subr.bf16.mxu0 %v1404
    %1823 = vmatpush1.bf16.msra.mxu0 %v1403
    %1824 = vmatprep.mubr.bf16.mxu0 %v118
    %1825 = vmatmul.mubr.bf16.gmra.mrb[0].mxu0 %v117
    %v1826 = vpop.f32.mrb[0].mxu0
    %v1827 = vadd.f32 %v1784, %v1826
    %v1828 = vpop.f32.mrb[0].mxu0
    %v1829 = vadd.f32 %v1786, %v1828
    %v1830 = vpop.f32.mrb[0].mxu0
    %v1831 = vadd.f32 %v1788, %v1830
    %v1832 = vpop.f32.mrb[0].mxu0
    %v1833 = vadd.f32 %v1790, %v1832
    %1834 = vdwg.mxu0
    %1835 = vmatprep.subr.bf16.mxu0 %v1154
    %1836 = vmatpush1.bf16.msra.mxu0 %v1153
    %1837 = vmatprep.subr.bf16.mxu0 %v1158
    %1838 = vmatpush1.bf16.msra.mxu0 %v1157
    %1839 = vmatprep.subr.bf16.mxu0 %v1162
    %1840 = vmatpush1.bf16.msra.mxu0 %v1161
    %1841 = vmatprep.subr.bf16.mxu0 %v1166
    %1842 = vmatpush1.bf16.msra.mxu0 %v1165
    %1843 = vmatprep.subr.bf16.mxu0 %v1170
    %1844 = vmatpush1.bf16.msra.mxu0 %v1169
    %1845 = vmatprep.subr.bf16.mxu0 %v1174
    %1846 = vmatpush1.bf16.msra.mxu0 %v1173
    %1847 = vmatprep.subr.bf16.mxu0 %v1178
    %1848 = vmatpush1.bf16.msra.mxu0 %v1177
    %1849 = vmatprep.subr.bf16.mxu0 %v1182
    %1850 = vmatpush1.bf16.msra.mxu0 %v1181
    %1851 = vmatprep.subr.bf16.mxu0 %v1186
    %1852 = vmatpush1.bf16.msra.mxu0 %v1185
    %1853 = vmatprep.subr.bf16.mxu0 %v1190
    %1854 = vmatpush1.bf16.msra.mxu0 %v1189
    %1855 = vmatprep.subr.bf16.mxu0 %v1194
    %1856 = vmatpush1.bf16.msra.mxu0 %v1193
    %1857 = vmatprep.subr.bf16.mxu0 %v1198
    %1858 = vmatpush1.bf16.msra.mxu0 %v1197
    %1859 = vmatprep.subr.bf16.mxu0 %v1202
    %1860 = vmatpush1.bf16.msra.mxu0 %v1201
    %1861 = vmatprep.subr.bf16.mxu0 %v1206
    %1862 = vmatpush1.bf16.msra.mxu0 %v1205
    %1863 = vmatprep.subr.bf16.mxu0 %v1210
    %1864 = vmatpush1.bf16.msra.mxu0 %v1209
    %1865 = vmatprep.subr.bf16.mxu0 %v1214
    %1866 = vmatpush1.bf16.msra.mxu0 %v1213
    %1867 = vmatprep.mubr.bf16.mxu0 %v112
    %1868 = vmatmul.mubr.bf16.gmra.mrb[0].mxu0 %v111
    %v1869 = vpop.f32.mrb[0].mxu0
    %v1870 = vadd.f32 0.0, %v1869
    %v1871 = vpop.f32.mrb[0].mxu0
    %v1872 = vadd.f32 0.0, %v1871
    %v1873 = vpop.f32.mrb[0].mxu0
    %v1874 = vadd.f32 0.0, %v1873
    %v1875 = vpop.f32.mrb[0].mxu0
    %v1876 = vadd.f32 0.0, %v1875
    %1877 = vdwg.mxu0
    %1878 = vmatprep.subr.bf16.mxu0 %v1218
    %1879 = vmatpush1.bf16.msra.mxu0 %v1217
    %1880 = vmatprep.subr.bf16.mxu0 %v1222
    %1881 = vmatpush1.bf16.msra.mxu0 %v1221
    %1882 = vmatprep.subr.bf16.mxu0 %v1226
    %1883 = vmatpush1.bf16.msra.mxu0 %v1225
    %1884 = vmatprep.subr.bf16.mxu0 %v1230
    %1885 = vmatpush1.bf16.msra.mxu0 %v1229
    %1886 = vmatprep.subr.bf16.mxu0 %v1234
    %1887 = vmatpush1.bf16.msra.mxu0 %v1233
    %1888 = vmatprep.subr.bf16.mxu0 %v1238
    %1889 = vmatpush1.bf16.msra.mxu0 %v1237
    %1890 = vmatprep.subr.bf16.mxu0 %v1242
    %1891 = vmatpush1.bf16.msra.mxu0 %v1241
    %1892 = vmatprep.subr.bf16.mxu0 %v1246
    %1893 = vmatpush1.bf16.msra.mxu0 %v1245
    %1894 = vmatprep.subr.bf16.mxu0 %v1250
    %1895 = vmatpush1.bf16.msra.mxu0 %v1249
    %1896 = vmatprep.subr.bf16.mxu0 %v1254
    %1897 = vmatpush1.bf16.msra.mxu0 %v1253
    %1898 = vmatprep.subr.bf16.mxu0 %v1258
    %1899 = vmatpush1.bf16.msra.mxu0 %v1257
    %1900 = vmatprep.subr.bf16.mxu0 %v1262
    %1901 = vmatpush1.bf16.msra.mxu0 %v1261
    %1902 = vmatprep.subr.bf16.mxu0 %v1266
    %1903 = vmatpush1.bf16.msra.mxu0 %v1265
    %1904 = vmatprep.subr.bf16.mxu0 %v1270
    %1905 = vmatpush1.bf16.msra.mxu0 %v1269
    %1906 = vmatprep.subr.bf16.mxu0 %v1274
    %1907 = vmatpush1.bf16.msra.mxu0 %v1273
    %1908 = vmatprep.subr.bf16.mxu0 %v1278
    %1909 = vmatpush1.bf16.msra.mxu0 %v1277
    %1910 = vmatprep.mubr.bf16.mxu0 %v114
    %1911 = vmatmul.mubr.bf16.gmra.mrb[0].mxu0 %v113
    %v1912 = vpop.f32.mrb[0].mxu0
    %v1913 = vadd.f32 %v1870, %v1912
    %v1914 = vpop.f32.mrb[0].mxu0
    %v1915 = vadd.f32 %v1872, %v1914
    %v1916 = vpop.f32.mrb[0].mxu0
    %v1917 = vadd.f32 %v1874, %v1916
    %v1918 = vpop.f32.mrb[0].mxu0
    %v1919 = vadd.f32 %v1876, %v1918
    %1920 = vdwg.mxu0
    %1921 = vmatprep.subr.bf16.mxu0 %v1282
    %1922 = vmatpush1.bf16.msra.mxu0 %v1281
    %1923 = vmatprep.subr.bf16.mxu0 %v1286
    %1924 = vmatpush1.bf16.msra.mxu0 %v1285
    %1925 = vmatprep.subr.bf16.mxu0 %v1290
    %1926 = vmatpush1.bf16.msra.mxu0 %v1289
    %1927 = vmatprep.subr.bf16.mxu0 %v1294
    %1928 = vmatpush1.bf16.msra.mxu0 %v1293
    %1929 = vmatprep.subr.bf16.mxu0 %v1298
    %1930 = vmatpush1.bf16.msra.mxu0 %v1297
    %1931 = vmatprep.subr.bf16.mxu0 %v1302
    %1932 = vmatpush1.bf16.msra.mxu0 %v1301
    %1933 = vmatprep.subr.bf16.mxu0 %v1306
    %1934 = vmatpush1.bf16.msra.mxu0 %v1305
    %1935 = vmatprep.subr.bf16.mxu0 %v1310
    %1936 = vmatpush1.bf16.msra.mxu0 %v1309
    %1937 = vmatprep.subr.bf16.mxu0 %v1314
    %1938 = vmatpush1.bf16.msra.mxu0 %v1313
    %1939 = vmatprep.subr.bf16.mxu0 %v1318
    %1940 = vmatpush1.bf16.msra.mxu0 %v1317
    %1941 = vmatprep.subr.bf16.mxu0 %v1322
    %1942 = vmatpush1.bf16.msra.mxu0 %v1321
    %1943 = vmatprep.subr.bf16.mxu0 %v1326
    %1944 = vmatpush1.bf16.msra.mxu0 %v1325
    %1945 = vmatprep.subr.bf16.mxu0 %v1330
    %1946 = vmatpush1.bf16.msra.mxu0 %v1329
    %1947 = vmatprep.subr.bf16.mxu0 %v1334
    %1948 = vmatpush1.bf16.msra.mxu0 %v1333
    %1949 = vmatprep.subr.bf16.mxu0 %v1338
    %1950 = vmatpush1.bf16.msra.mxu0 %v1337
    %1951 = vmatprep.subr.bf16.mxu0 %v1342
    %1952 = vmatpush1.bf16.msra.mxu0 %v1341
    %1953 = vmatprep.mubr.bf16.mxu0 %v116
    %1954 = vmatmul.mubr.bf16.gmra.mrb[0].mxu0 %v115
    %v1955 = vpop.f32.mrb[0].mxu0
    %v1956 = vadd.f32 %v1913, %v1955
    %v1957 = vpop.f32.mrb[0].mxu0
    %v1958 = vadd.f32 %v1915, %v1957
    %v1959 = vpop.f32.mrb[0].mxu0
    %v1960 = vadd.f32 %v1917, %v1959
    %v1961 = vpop.f32.mrb[0].mxu0
    %v1962 = vadd.f32 %v1919, %v1961
    %1963 = vdwg.mxu0
    %1964 = vmatprep.subr.bf16.mxu0 %v1346
    %1965 = vmatpush1.bf16.msra.mxu0 %v1345
    %1966 = vmatprep.subr.bf16.mxu0 %v1350
    %1967 = vmatpush1.bf16.msra.mxu0 %v1349
    %1968 = vmatprep.subr.bf16.mxu0 %v1354
    %1969 = vmatpush1.bf16.msra.mxu0 %v1353
    %1970 = vmatprep.subr.bf16.mxu0 %v1358
    %1971 = vmatpush1.bf16.msra.mxu0 %v1357
    %1972 = vmatprep.subr.bf16.mxu0 %v1362
    %1973 = vmatpush1.bf16.msra.mxu0 %v1361
    %1974 = vmatprep.subr.bf16.mxu0 %v1366
    %1975 = vmatpush1.bf16.msra.mxu0 %v1365
    %1976 = vmatprep.subr.bf16.mxu0 %v1370
    %1977 = vmatpush1.bf16.msra.mxu0 %v1369
    %1978 = vmatprep.subr.bf16.mxu0 %v1374
    %1979 = vmatpush1.bf16.msra.mxu0 %v1373
    %1980 = vmatprep.subr.bf16.mxu0 %v1378
    %1981 = vmatpush1.bf16.msra.mxu0 %v1377
    %1982 = vmatprep.subr.bf16.mxu0 %v1382
    %1983 = vmatpush1.bf16.msra.mxu0 %v1381
    %1984 = vmatprep.subr.bf16.mxu0 %v1386
    %1985 = vmatpush1.bf16.msra.mxu0 %v1385
    %1986 = vmatprep.subr.bf16.mxu0 %v1390
    %1987 = vmatpush1.bf16.msra.mxu0 %v1389
    %1988 = vmatprep.subr.bf16.mxu0 %v1394
    %1989 = vmatpush1.bf16.msra.mxu0 %v1393
    %1990 = vmatprep.subr.bf16.mxu0 %v1398
    %1991 = vmatpush1.bf16.msra.mxu0 %v1397
    %1992 = vmatprep.subr.bf16.mxu0 %v1402
    %1993 = vmatpush1.bf16.msra.mxu0 %v1401
    %1994 = vmatprep.subr.bf16.mxu0 %v1406
    %1995 = vmatpush1.bf16.msra.mxu0 %v1405
    %1996 = vmatprep.mubr.bf16.mxu0 %v118
    %1997 = vmatmul.mubr.bf16.gmra.mrb[0].mxu0 %v117
    %v1998 = vpop.f32.mrb[0].mxu0
    %v1999 = vadd.f32 %v1956, %v1998
    %v2000 = vpop.f32.mrb[0].mxu0
    %v2001 = vadd.f32 %v1958, %v2000
    %v2002 = vpop.f32.mrb[0].mxu0
    %v2003 = vadd.f32 %v1960, %v2002
    %v2004 = vpop.f32.mrb[0].mxu0
    %v2005 = vadd.f32 %v1962, %v2004
    %2006 = vdwg.mxu0
    %v2007 = vadd.f32 %v119, %v1827
    %v2008 = vadd.f32 %v120, %v1829
    %v2009 = vadd.f32 %v121, %v1999
    %v2010 = vadd.f32 %v122, %v2001
    %v2011 = vadd.f32 %v123, %v1831
    %v2012 = vadd.f32 %v124, %v1833
    %v2013 = vadd.f32 %v125, %v2003
    %v2014 = vadd.f32 %v126, %v2005
    %2015 = vst [vmem:[#allocation2] sm:$0xff] %v2007
    %2016 = vst [vmem:[#allocation2 + $0x8] sm:$0xff] %v2008
    %2017 = vst [vmem:[#allocation2 + $0x10] sm:$0xff] %v2009
    %2018 = vst [vmem:[#allocation2 + $0x18] sm:$0xff] %v2010
    %2019 = vst [vmem:[#allocation2 + $0x20] sm:$0xff] %v2011
    %2020 = vst [vmem:[#allocation2 + $0x28] sm:$0xff] %v2012
    %2021 = vst [vmem:[#allocation2 + $0x30] sm:$0xff] %v2013
    %2022 = vst [vmem:[#allocation2 + $0x38] sm:$0xff] %v2014
    // Predicated region
    $region50: #{tpu_custom_call.1} parent=1 // pred_check
      %p2023 = pneg %p83
    $region51: #{tpu_custom_call.1} parent=1 // pred_check_branch
      %2025 = sbr.rel (%p2023) target = $region53
    $region52: #{tpu_custom_call.1} parent=1 // pred_region
      %v2026 = vld [vmem:[#allocation2] sm:$0xff]
      %v2027 = vld [vmem:[#allocation2 + $0x8] sm:$0xff]
      %v2028 = vld [vmem:[#allocation2 + $0x10] sm:$0xff]
      %v2029 = vld [vmem:[#allocation2 + $0x18] sm:$0xff]
      %v2030 = vld [vmem:[#allocation2 + $0x20] sm:$0xff]
      %v2031 = vld [vmem:[#allocation2 + $0x28] sm:$0xff]
      %v2032 = vld [vmem:[#allocation2 + $0x30] sm:$0xff]
      %v2033 = vld [vmem:[#allocation2 + $0x38] sm:$0xff]
      %v2034 = vld [vmem:[%s2] sm:$0xf]
      %v2036 = vlaneseq
      %v2037 = vshrl.u32 %v2036, 7
      %v2038 = vsub.s32 0, %v2037
      %v2039 = vrot.slane %v2034, %v2038
      %v2040 = vlaneseq
      %v2041 = vshrl.u32 %v2040, 7
      %v2042 = vsub.s32 1, %v2041
      %v2043 = vrot.slane %v2034, %v2042
      %v2044 = vlaneseq
      %v2045 = vshrl.u32 %v2044, 7
      %v2046 = vsub.s32 2, %v2045
      %v2047 = vrot.slane %v2034, %v2046
      %v2048 = vlaneseq
      %v2049 = vshrl.u32 %v2048, 7
      %v2050 = vsub.s32 3, %v2049
      %v2051 = vrot.slane %v2034, %v2050
      %v2056 = vadd.f32 %v2026, %v2039
      %v2057 = vadd.f32 %v2027, %v2043
      %v2058 = vadd.f32 %v2028, %v2047
      %v2059 = vadd.f32 %v2029, %v2051
      %v2060 = vadd.f32 %v2030, %v2039
      %v2061 = vadd.f32 %v2031, %v2043
      %v2062 = vadd.f32 %v2032, %v2047
      %v2063 = vadd.f32 %v2033, %v2051
      %v2064 = vmax.f32 %v2056, 0.0
      %v2065 = vmax.f32 %v2057, 0.0
      %v2066 = vmax.f32 %v2058, 0.0
      %v2067 = vmax.f32 %v2059, 0.0
      %v2068 = vmax.f32 %v2060, 0.0
      %v2069 = vmax.f32 %v2061, 0.0
      %v2070 = vmax.f32 %v2062, 0.0
      %v2071 = vmax.f32 %v2063, 0.0
      %v2072 = vpack.c.bf16 %v2068, %v2064
      %v2073 = vpack.c.bf16 %v2069, %v2065
      %v2074 = vpack.c.bf16 %v2070, %v2066
      %v2075 = vpack.c.bf16 %v2071, %v2067
      %v2076 = vld [vmem:[#allocation8] sm:$0xff]
      %v2077 = vld [vmem:[#allocation8 + $0x8] sm:$0xff]
      %v2078 = vld [vmem:[#allocation8 + $0x10] sm:$0xff]
      %v2079 = vld [vmem:[#allocation8 + $0x18] sm:$0xff]
      %v2080 = vld [vmem:[#allocation8 + $0x20] sm:$0xff]
      %v2081 = vld [vmem:[#allocation8 + $0x28] sm:$0xff]
      %v2082 = vld [vmem:[#allocation8 + $0x30] sm:$0xff]
      %v2083 = vld [vmem:[#allocation8 + $0x38] sm:$0xff]
      %v2084 = vld [vmem:[#allocation8 + $0x40] sm:$0xff]
      %v2085 = vld [vmem:[#allocation8 + $0x48] sm:$0xff]
      %v2086 = vld [vmem:[#allocation8 + $0x50] sm:$0xff]
      %v2087 = vld [vmem:[#allocation8 + $0x58] sm:$0xff]
      %v2088 = vld [vmem:[#allocation8 + $0x60] sm:$0xff]
      %v2089 = vld [vmem:[#allocation8 + $0x68] sm:$0xff]
      %v2090 = vld [vmem:[#allocation8 + $0x70] sm:$0xff]
      %v2091 = vld [vmem:[#allocation8 + $0x78] sm:$0xff]
      %v2092 = vld [vmem:[#allocation8 + $0x80] sm:$0xff]
      %v2093 = vld [vmem:[#allocation8 + $0x88] sm:$0xff]
      %v2094 = vld [vmem:[#allocation8 + $0x90] sm:$0xff]
      %v2095 = vld [vmem:[#allocation8 + $0x98] sm:$0xff]
      %v2096 = vld [vmem:[#allocation8 + $0xa0] sm:$0xff]
      %v2097 = vld [vmem:[#allocation8 + $0xa8] sm:$0xff]
      %v2098 = vld [vmem:[#allocation8 + $0xb0] sm:$0xff]
      %v2099 = vld [vmem:[#allocation8 + $0xb8] sm:$0xff]
      %v2100 = vld [vmem:[#allocation8 + $0xc0] sm:$0xff]
      %v2101 = vld [vmem:[#allocation8 + $0xc8] sm:$0xff]
      %v2102 = vld [vmem:[#allocation8 + $0xd0] sm:$0xff]
      %v2103 = vld [vmem:[#allocation8 + $0xd8] sm:$0xff]
      %v2104 = vld [vmem:[#allocation8 + $0xe0] sm:$0xff]
      %v2105 = vld [vmem:[#allocation8 + $0xe8] sm:$0xff]
      %v2106 = vld [vmem:[#allocation8 + $0xf0] sm:$0xff]
      %v2107 = vld [vmem:[#allocation8 + $0xf8] sm:$0xff]
      %v2108 = vld [vmem:[#allocation8 + $0x100] sm:$0xff]
      %v2109 = vld [vmem:[#allocation8 + $0x108] sm:$0xff]
      %v2110 = vld [vmem:[#allocation8 + $0x110] sm:$0xff]
      %v2111 = vld [vmem:[#allocation8 + $0x118] sm:$0xff]
      %v2112 = vld [vmem:[#allocation8 + $0x120] sm:$0xff]
      %v2113 = vld [vmem:[#allocation8 + $0x128] sm:$0xff]
      %v2114 = vld [vmem:[#allocation8 + $0x130] sm:$0xff]
      %v2115 = vld [vmem:[#allocation8 + $0x138] sm:$0xff]
      %v2116 = vld [vmem:[#allocation8 + $0x140] sm:$0xff]
      %v2117 = vld [vmem:[#allocation8 + $0x148] sm:$0xff]
      %v2118 = vld [vmem:[#allocation8 + $0x150] sm:$0xff]
      %v2119 = vld [vmem:[#allocation8 + $0x158] sm:$0xff]
      %v2120 = vld [vmem:[#allocation8 + $0x160] sm:$0xff]
      %v2121 = vld [vmem:[#allocation8 + $0x168] sm:$0xff]
      %v2122 = vld [vmem:[#allocation8 + $0x170] sm:$0xff]
      %v2123 = vld [vmem:[#allocation8 + $0x178] sm:$0xff]
      %v2124 = vld [vmem:[#allocation8 + $0x180] sm:$0xff]
      %v2125 = vld [vmem:[#allocation8 + $0x188] sm:$0xff]
      %v2126 = vld [vmem:[#allocation8 + $0x190] sm:$0xff]
      %v2127 = vld [vmem:[#allocation8 + $0x198] sm:$0xff]
      %v2128 = vld [vmem:[#allocation8 + $0x1a0] sm:$0xff]
      %v2129 = vld [vmem:[#allocation8 + $0x1a8] sm:$0xff]
      %v2130 = vld [vmem:[#allocation8 + $0x1b0] sm:$0xff]
      %v2131 = vld [vmem:[#allocation8 + $0x1b8] sm:$0xff]
      %v2132 = vld [vmem:[#allocation8 + $0x1c0] sm:$0xff]
      %v2133 = vld [vmem:[#allocation8 + $0x1c8] sm:$0xff]
      %v2134 = vld [vmem:[#allocation8 + $0x1d0] sm:$0xff]
      %v2135 = vld [vmem:[#allocation8 + $0x1d8] sm:$0xff]
      %v2136 = vld [vmem:[#allocation8 + $0x1e0] sm:$0xff]
      %v2137 = vld [vmem:[#allocation8 + $0x1e8] sm:$0xff]
      %v2138 = vld [vmem:[#allocation8 + $0x1f0] sm:$0xff]
      %v2139 = vld [vmem:[#allocation8 + $0x1f8] sm:$0xff]
      %v2140 = vld [vmem:[#allocation8 + $0x200] sm:$0xff]
      %v2141 = vld [vmem:[#allocation8 + $0x208] sm:$0xff]
      %v2142 = vld [vmem:[#allocation8 + $0x210] sm:$0xff]
      %v2143 = vld [vmem:[#allocation8 + $0x218] sm:$0xff]
      %v2144 = vld [vmem:[#allocation8 + $0x220] sm:$0xff]
      %v2145 = vld [vmem:[#allocation8 + $0x228] sm:$0xff]
      %v2146 = vld [vmem:[#allocation8 + $0x230] sm:$0xff]
      %v2147 = vld [vmem:[#allocation8 + $0x238] sm:$0xff]
      %v2148 = vld [vmem:[#allocation8 + $0x240] sm:$0xff]
      %v2149 = vld [vmem:[#allocation8 + $0x248] sm:$0xff]
      %v2150 = vld [vmem:[#allocation8 + $0x250] sm:$0xff]
      %v2151 = vld [vmem:[#allocation8 + $0x258] sm:$0xff]
      %v2152 = vld [vmem:[#allocation8 + $0x260] sm:$0xff]
      %v2153 = vld [vmem:[#allocation8 + $0x268] sm:$0xff]
      %v2154 = vld [vmem:[#allocation8 + $0x270] sm:$0xff]
      %v2155 = vld [vmem:[#allocation8 + $0x278] sm:$0xff]
      %v2156 = vld [vmem:[#allocation8 + $0x280] sm:$0xff]
      %v2157 = vld [vmem:[#allocation8 + $0x288] sm:$0xff]
      %v2158 = vld [vmem:[#allocation8 + $0x290] sm:$0xff]
      %v2159 = vld [vmem:[#allocation8 + $0x298] sm:$0xff]
      %v2160 = vld [vmem:[#allocation8 + $0x2a0] sm:$0xff]
      %v2161 = vld [vmem:[#allocation8 + $0x2a8] sm:$0xff]
      %v2162 = vld [vmem:[#allocation8 + $0x2b0] sm:$0xff]
      %v2163 = vld [vmem:[#allocation8 + $0x2b8] sm:$0xff]
      %v2164 = vld [vmem:[#allocation8 + $0x2c0] sm:$0xff]
      %v2165 = vld [vmem:[#allocation8 + $0x2c8] sm:$0xff]
      %v2166 = vld [vmem:[#allocation8 + $0x2d0] sm:$0xff]
      %v2167 = vld [vmem:[#allocation8 + $0x2d8] sm:$0xff]
      %v2168 = vld [vmem:[#allocation8 + $0x2e0] sm:$0xff]
      %v2169 = vld [vmem:[#allocation8 + $0x2e8] sm:$0xff]
      %v2170 = vld [vmem:[#allocation8 + $0x2f0] sm:$0xff]
      %v2171 = vld [vmem:[#allocation8 + $0x2f8] sm:$0xff]
      %v2172 = vld [vmem:[#allocation8 + $0x300] sm:$0xff]
      %v2173 = vld [vmem:[#allocation8 + $0x308] sm:$0xff]
      %v2174 = vld [vmem:[#allocation8 + $0x310] sm:$0xff]
      %v2175 = vld [vmem:[#allocation8 + $0x318] sm:$0xff]
      %v2176 = vld [vmem:[#allocation8 + $0x320] sm:$0xff]
      %v2177 = vld [vmem:[#allocation8 + $0x328] sm:$0xff]
      %v2178 = vld [vmem:[#allocation8 + $0x330] sm:$0xff]
      %v2179 = vld [vmem:[#allocation8 + $0x338] sm:$0xff]
      %v2180 = vld [vmem:[#allocation8 + $0x340] sm:$0xff]
      %v2181 = vld [vmem:[#allocation8 + $0x348] sm:$0xff]
      %v2182 = vld [vmem:[#allocation8 + $0x350] sm:$0xff]
      %v2183 = vld [vmem:[#allocation8 + $0x358] sm:$0xff]
      %v2184 = vld [vmem:[#allocation8 + $0x360] sm:$0xff]
      %v2185 = vld [vmem:[#allocation8 + $0x368] sm:$0xff]
      %v2186 = vld [vmem:[#allocation8 + $0x370] sm:$0xff]
      %v2187 = vld [vmem:[#allocation8 + $0x378] sm:$0xff]
      %v2188 = vld [vmem:[#allocation8 + $0x380] sm:$0xff]
      %v2189 = vld [vmem:[#allocation8 + $0x388] sm:$0xff]
      %v2190 = vld [vmem:[#allocation8 + $0x390] sm:$0xff]
      %v2191 = vld [vmem:[#allocation8 + $0x398] sm:$0xff]
      %v2192 = vld [vmem:[#allocation8 + $0x3a0] sm:$0xff]
      %v2193 = vld [vmem:[#allocation8 + $0x3a8] sm:$0xff]
      %v2194 = vld [vmem:[#allocation8 + $0x3b0] sm:$0xff]
      %v2195 = vld [vmem:[#allocation8 + $0x3b8] sm:$0xff]
      %v2196 = vld [vmem:[#allocation8 + $0x3c0] sm:$0xff]
      %v2197 = vld [vmem:[#allocation8 + $0x3c8] sm:$0xff]
      %v2198 = vld [vmem:[#allocation8 + $0x3d0] sm:$0xff]
      %v2199 = vld [vmem:[#allocation8 + $0x3d8] sm:$0xff]
      %v2200 = vld [vmem:[#allocation8 + $0x3e0] sm:$0xff]
      %v2201 = vld [vmem:[#allocation8 + $0x3e8] sm:$0xff]
      %v2202 = vld [vmem:[#allocation8 + $0x3f0] sm:$0xff]
      %v2203 = vld [vmem:[#allocation8 + $0x3f8] sm:$0xff]
      %v2204 = vld [vmem:[%s4] sm:$0xf]
      %v2206 = vlaneseq
      %v2207 = vshrl.u32 %v2206, 7
      %v2208 = vsub.s32 0, %v2207
      %v2209 = vrot.slane %v2204, %v2208
      %v2210 = vlaneseq
      %v2211 = vshrl.u32 %v2210, 7
      %v2212 = vsub.s32 1, %v2211
      %v2213 = vrot.slane %v2204, %v2212
      %v2214 = vlaneseq
      %v2215 = vshrl.u32 %v2214, 7
      %v2216 = vsub.s32 2, %v2215
      %v2217 = vrot.slane %v2204, %v2216
      %v2218 = vlaneseq
      %v2219 = vshrl.u32 %v2218, 7
      %v2220 = vsub.s32 3, %v2219
      %v2221 = vrot.slane %v2204, %v2220
      %v2354 = vunpack.c.l.b16 %v2076
      %v2355 = vunpack.c.h.b16 %v2076
      %v2356 = vunpack.c.l.b16 %v2077
      %v2357 = vunpack.c.h.b16 %v2077
      %v2358 = vunpack.c.l.b16 %v2078
      %v2359 = vunpack.c.h.b16 %v2078
      %v2360 = vunpack.c.l.b16 %v2079
      %v2361 = vunpack.c.h.b16 %v2079
      %v2362 = vunpack.c.l.b16 %v2080
      %v2363 = vunpack.c.h.b16 %v2080
      %v2364 = vunpack.c.l.b16 %v2081
      %v2365 = vunpack.c.h.b16 %v2081
      %v2366 = vunpack.c.l.b16 %v2082
      %v2367 = vunpack.c.h.b16 %v2082
      %v2368 = vunpack.c.l.b16 %v2083
      %v2369 = vunpack.c.h.b16 %v2083
      %v2370 = vunpack.c.l.b16 %v2084
      %v2371 = vunpack.c.h.b16 %v2084
      %v2372 = vunpack.c.l.b16 %v2085
      %v2373 = vunpack.c.h.b16 %v2085
      %v2374 = vunpack.c.l.b16 %v2086
      %v2375 = vunpack.c.h.b16 %v2086
      %v2376 = vunpack.c.l.b16 %v2087
      %v2377 = vunpack.c.h.b16 %v2087
      %v2378 = vunpack.c.l.b16 %v2088
      %v2379 = vunpack.c.h.b16 %v2088
      %v2380 = vunpack.c.l.b16 %v2089
      %v2381 = vunpack.c.h.b16 %v2089
      %v2382 = vunpack.c.l.b16 %v2090
      %v2383 = vunpack.c.h.b16 %v2090
      %v2384 = vunpack.c.l.b16 %v2091
      %v2385 = vunpack.c.h.b16 %v2091
      %v2386 = vunpack.c.l.b16 %v2092
      %v2387 = vunpack.c.h.b16 %v2092
      %v2388 = vunpack.c.l.b16 %v2093
      %v2389 = vunpack.c.h.b16 %v2093
      %v2390 = vunpack.c.l.b16 %v2094
      %v2391 = vunpack.c.h.b16 %v2094
      %v2392 = vunpack.c.l.b16 %v2095
      %v2393 = vunpack.c.h.b16 %v2095
      %v2394 = vunpack.c.l.b16 %v2096
      %v2395 = vunpack.c.h.b16 %v2096
      %v2396 = vunpack.c.l.b16 %v2097
      %v2397 = vunpack.c.h.b16 %v2097
      %v2398 = vunpack.c.l.b16 %v2098
      %v2399 = vunpack.c.h.b16 %v2098
      %v2400 = vunpack.c.l.b16 %v2099
      %v2401 = vunpack.c.h.b16 %v2099
      %v2402 = vunpack.c.l.b16 %v2100
      %v2403 = vunpack.c.h.b16 %v2100
      %v2404 = vunpack.c.l.b16 %v2101
      %v2405 = vunpack.c.h.b16 %v2101
      %v2406 = vunpack.c.l.b16 %v2102
      %v2407 = vunpack.c.h.b16 %v2102
      %v2408 = vunpack.c.l.b16 %v2103
      %v2409 = vunpack.c.h.b16 %v2103
      %v2410 = vunpack.c.l.b16 %v2104
      %v2411 = vunpack.c.h.b16 %v2104
      %v2412 = vunpack.c.l.b16 %v2105
      %v2413 = vunpack.c.h.b16 %v2105
      %v2414 = vunpack.c.l.b16 %v2106
      %v2415 = vunpack.c.h.b16 %v2106
      %v2416 = vunpack.c.l.b16 %v2107
      %v2417 = vunpack.c.h.b16 %v2107
      %v2418 = vunpack.c.l.b16 %v2108
      %v2419 = vunpack.c.h.b16 %v2108
      %v2420 = vunpack.c.l.b16 %v2109
      %v2421 = vunpack.c.h.b16 %v2109
      %v2422 = vunpack.c.l.b16 %v2110
      %v2423 = vunpack.c.h.b16 %v2110
      %v2424 = vunpack.c.l.b16 %v2111
      %v2425 = vunpack.c.h.b16 %v2111
      %v2426 = vunpack.c.l.b16 %v2112
      %v2427 = vunpack.c.h.b16 %v2112
      %v2428 = vunpack.c.l.b16 %v2113
      %v2429 = vunpack.c.h.b16 %v2113
      %v2430 = vunpack.c.l.b16 %v2114
      %v2431 = vunpack.c.h.b16 %v2114
      %v2432 = vunpack.c.l.b16 %v2115
      %v2433 = vunpack.c.h.b16 %v2115
      %v2434 = vunpack.c.l.b16 %v2116
      %v2435 = vunpack.c.h.b16 %v2116
      %v2436 = vunpack.c.l.b16 %v2117
      %v2437 = vunpack.c.h.b16 %v2117
      %v2438 = vunpack.c.l.b16 %v2118
      %v2439 = vunpack.c.h.b16 %v2118
      %v2440 = vunpack.c.l.b16 %v2119
      %v2441 = vunpack.c.h.b16 %v2119
      %v2442 = vunpack.c.l.b16 %v2120
      %v2443 = vunpack.c.h.b16 %v2120
      %v2444 = vunpack.c.l.b16 %v2121
      %v2445 = vunpack.c.h.b16 %v2121
      %v2446 = vunpack.c.l.b16 %v2122
      %v2447 = vunpack.c.h.b16 %v2122
      %v2448 = vunpack.c.l.b16 %v2123
      %v2449 = vunpack.c.h.b16 %v2123
      %v2450 = vunpack.c.l.b16 %v2124
      %v2451 = vunpack.c.h.b16 %v2124
      %v2452 = vunpack.c.l.b16 %v2125
      %v2453 = vunpack.c.h.b16 %v2125
      %v2454 = vunpack.c.l.b16 %v2126
      %v2455 = vunpack.c.h.b16 %v2126
      %v2456 = vunpack.c.l.b16 %v2127
      %v2457 = vunpack.c.h.b16 %v2127
      %v2458 = vunpack.c.l.b16 %v2128
      %v2459 = vunpack.c.h.b16 %v2128
      %v2460 = vunpack.c.l.b16 %v2129
      %v2461 = vunpack.c.h.b16 %v2129
      %v2462 = vunpack.c.l.b16 %v2130
      %v2463 = vunpack.c.h.b16 %v2130
      %v2464 = vunpack.c.l.b16 %v2131
      %v2465 = vunpack.c.h.b16 %v2131
      %v2466 = vunpack.c.l.b16 %v2132
      %v2467 = vunpack.c.h.b16 %v2132
      %v2468 = vunpack.c.l.b16 %v2133
      %v2469 = vunpack.c.h.b16 %v2133
      %v2470 = vunpack.c.l.b16 %v2134
      %v2471 = vunpack.c.h.b16 %v2134
      %v2472 = vunpack.c.l.b16 %v2135
      %v2473 = vunpack.c.h.b16 %v2135
      %v2474 = vunpack.c.l.b16 %v2136
      %v2475 = vunpack.c.h.b16 %v2136
      %v2476 = vunpack.c.l.b16 %v2137
      %v2477 = vunpack.c.h.b16 %v2137
      %v2478 = vunpack.c.l.b16 %v2138
      %v2479 = vunpack.c.h.b16 %v2138
      %v2480 = vunpack.c.l.b16 %v2139
      %v2481 = vunpack.c.h.b16 %v2139
      %v2482 = vunpack.c.l.b16 %v2140
      %v2483 = vunpack.c.h.b16 %v2140
      %v2484 = vunpack.c.l.b16 %v2141
      %v2485 = vunpack.c.h.b16 %v2141
      %v2486 = vunpack.c.l.b16 %v2142
      %v2487 = vunpack.c.h.b16 %v2142
      %v2488 = vunpack.c.l.b16 %v2143
      %v2489 = vunpack.c.h.b16 %v2143
      %v2490 = vunpack.c.l.b16 %v2144
      %v2491 = vunpack.c.h.b16 %v2144
      %v2492 = vunpack.c.l.b16 %v2145
      %v2493 = vunpack.c.h.b16 %v2145
      %v2494 = vunpack.c.l.b16 %v2146
      %v2495 = vunpack.c.h.b16 %v2146
      %v2496 = vunpack.c.l.b16 %v2147
      %v2497 = vunpack.c.h.b16 %v2147
      %v2498 = vunpack.c.l.b16 %v2148
      %v2499 = vunpack.c.h.b16 %v2148
      %v2500 = vunpack.c.l.b16 %v2149
      %v2501 = vunpack.c.h.b16 %v2149
      %v2502 = vunpack.c.l.b16 %v2150
      %v2503 = vunpack.c.h.b16 %v2150
      %v2504 = vunpack.c.l.b16 %v2151
      %v2505 = vunpack.c.h.b16 %v2151
      %v2506 = vunpack.c.l.b16 %v2152
      %v2507 = vunpack.c.h.b16 %v2152
      %v2508 = vunpack.c.l.b16 %v2153
      %v2509 = vunpack.c.h.b16 %v2153
      %v2510 = vunpack.c.l.b16 %v2154
      %v2511 = vunpack.c.h.b16 %v2154
      %v2512 = vunpack.c.l.b16 %v2155
      %v2513 = vunpack.c.h.b16 %v2155
      %v2514 = vunpack.c.l.b16 %v2156
      %v2515 = vunpack.c.h.b16 %v2156
      %v2516 = vunpack.c.l.b16 %v2157
      %v2517 = vunpack.c.h.b16 %v2157
      %v2518 = vunpack.c.l.b16 %v2158
      %v2519 = vunpack.c.h.b16 %v2158
      %v2520 = vunpack.c.l.b16 %v2159
      %v2521 = vunpack.c.h.b16 %v2159
      %v2522 = vunpack.c.l.b16 %v2160
      %v2523 = vunpack.c.h.b16 %v2160
      %v2524 = vunpack.c.l.b16 %v2161
      %v2525 = vunpack.c.h.b16 %v2161
      %v2526 = vunpack.c.l.b16 %v2162
      %v2527 = vunpack.c.h.b16 %v2162
      %v2528 = vunpack.c.l.b16 %v2163
      %v2529 = vunpack.c.h.b16 %v2163
      %v2530 = vunpack.c.l.b16 %v2164
      %v2531 = vunpack.c.h.b16 %v2164
      %v2532 = vunpack.c.l.b16 %v2165
      %v2533 = vunpack.c.h.b16 %v2165
      %v2534 = vunpack.c.l.b16 %v2166
      %v2535 = vunpack.c.h.b16 %v2166
      %v2536 = vunpack.c.l.b16 %v2167
      %v2537 = vunpack.c.h.b16 %v2167
      %v2538 = vunpack.c.l.b16 %v2168
      %v2539 = vunpack.c.h.b16 %v2168
      %v2540 = vunpack.c.l.b16 %v2169
      %v2541 = vunpack.c.h.b16 %v2169
      %v2542 = vunpack.c.l.b16 %v2170
      %v2543 = vunpack.c.h.b16 %v2170
      %v2544 = vunpack.c.l.b16 %v2171
      %v2545 = vunpack.c.h.b16 %v2171
      %v2546 = vunpack.c.l.b16 %v2172
      %v2547 = vunpack.c.h.b16 %v2172
      %v2548 = vunpack.c.l.b16 %v2173
      %v2549 = vunpack.c.h.b16 %v2173
      %v2550 = vunpack.c.l.b16 %v2174
      %v2551 = vunpack.c.h.b16 %v2174
      %v2552 = vunpack.c.l.b16 %v2175
      %v2553 = vunpack.c.h.b16 %v2175
      %v2554 = vunpack.c.l.b16 %v2176
      %v2555 = vunpack.c.h.b16 %v2176
      %v2556 = vunpack.c.l.b16 %v2177
      %v2557 = vunpack.c.h.b16 %v2177
      %v2558 = vunpack.c.l.b16 %v2178
      %v2559 = vunpack.c.h.b16 %v2178
      %v2560 = vunpack.c.l.b16 %v2179
      %v2561 = vunpack.c.h.b16 %v2179
      %v2562 = vunpack.c.l.b16 %v2180
      %v2563 = vunpack.c.h.b16 %v2180
      %v2564 = vunpack.c.l.b16 %v2181
      %v2565 = vunpack.c.h.b16 %v2181
      %v2566 = vunpack.c.l.b16 %v2182
      %v2567 = vunpack.c.h.b16 %v2182
      %v2568 = vunpack.c.l.b16 %v2183
      %v2569 = vunpack.c.h.b16 %v2183
      %v2570 = vunpack.c.l.b16 %v2184
      %v2571 = vunpack.c.h.b16 %v2184
      %v2572 = vunpack.c.l.b16 %v2185
      %v2573 = vunpack.c.h.b16 %v2185
      %v2574 = vunpack.c.l.b16 %v2186
      %v2575 = vunpack.c.h.b16 %v2186
      %v2576 = vunpack.c.l.b16 %v2187
      %v2577 = vunpack.c.h.b16 %v2187
      %v2578 = vunpack.c.l.b16 %v2188
      %v2579 = vunpack.c.h.b16 %v2188
      %v2580 = vunpack.c.l.b16 %v2189
      %v2581 = vunpack.c.h.b16 %v2189
      %v2582 = vunpack.c.l.b16 %v2190
      %v2583 = vunpack.c.h.b16 %v2190
      %v2584 = vunpack.c.l.b16 %v2191
      %v2585 = vunpack.c.h.b16 %v2191
      %v2586 = vunpack.c.l.b16 %v2192
      %v2587 = vunpack.c.h.b16 %v2192
      %v2588 = vunpack.c.l.b16 %v2193
      %v2589 = vunpack.c.h.b16 %v2193
      %v2590 = vunpack.c.l.b16 %v2194
      %v2591 = vunpack.c.h.b16 %v2194
      %v2592 = vunpack.c.l.b16 %v2195
      %v2593 = vunpack.c.h.b16 %v2195
      %v2594 = vunpack.c.l.b16 %v2196
      %v2595 = vunpack.c.h.b16 %v2196
      %v2596 = vunpack.c.l.b16 %v2197
      %v2597 = vunpack.c.h.b16 %v2197
      %v2598 = vunpack.c.l.b16 %v2198
      %v2599 = vunpack.c.h.b16 %v2198
      %v2600 = vunpack.c.l.b16 %v2199
      %v2601 = vunpack.c.h.b16 %v2199
      %v2602 = vunpack.c.l.b16 %v2200
      %v2603 = vunpack.c.h.b16 %v2200
      %v2604 = vunpack.c.l.b16 %v2201
      %v2605 = vunpack.c.h.b16 %v2201
      %v2606 = vunpack.c.l.b16 %v2202
      %v2607 = vunpack.c.h.b16 %v2202
      %v2608 = vunpack.c.l.b16 %v2203
      %v2609 = vunpack.c.h.b16 %v2203
      %v2610 = vpack.c.b16 %v2358, %v2354
      %v2611 = vpack.c.b16 %v2359, %v2355
      %v2612 = vpack.c.b16 %v2360, %v2356
      %v2613 = vpack.c.b16 %v2361, %v2357
      %v2614 = vpack.c.b16 %v2366, %v2362
      %v2615 = vpack.c.b16 %v2367, %v2363
      %v2616 = vpack.c.b16 %v2368, %v2364
      %v2617 = vpack.c.b16 %v2369, %v2365
      %v2618 = vpack.c.b16 %v2374, %v2370
      %v2619 = vpack.c.b16 %v2375, %v2371
      %v2620 = vpack.c.b16 %v2376, %v2372
      %v2621 = vpack.c.b16 %v2377, %v2373
      %v2622 = vpack.c.b16 %v2382, %v2378
      %v2623 = vpack.c.b16 %v2383, %v2379
      %v2624 = vpack.c.b16 %v2384, %v2380
      %v2625 = vpack.c.b16 %v2385, %v2381
      %v2626 = vpack.c.b16 %v2390, %v2386
      %v2627 = vpack.c.b16 %v2391, %v2387
      %v2628 = vpack.c.b16 %v2392, %v2388
      %v2629 = vpack.c.b16 %v2393, %v2389
      %v2630 = vpack.c.b16 %v2398, %v2394
      %v2631 = vpack.c.b16 %v2399, %v2395
      %v2632 = vpack.c.b16 %v2400, %v2396
      %v2633 = vpack.c.b16 %v2401, %v2397
      %v2634 = vpack.c.b16 %v2406, %v2402
      %v2635 = vpack.c.b16 %v2407, %v2403
      %v2636 = vpack.c.b16 %v2408, %v2404
      %v2637 = vpack.c.b16 %v2409, %v2405
      %v2638 = vpack.c.b16 %v2414, %v2410
      %v2639 = vpack.c.b16 %v2415, %v2411
      %v2640 = vpack.c.b16 %v2416, %v2412
      %v2641 = vpack.c.b16 %v2417, %v2413
      %v2642 = vpack.c.b16 %v2422, %v2418
      %v2643 = vpack.c.b16 %v2423, %v2419
      %v2644 = vpack.c.b16 %v2424, %v2420
      %v2645 = vpack.c.b16 %v2425, %v2421
      %v2646 = vpack.c.b16 %v2430, %v2426
      %v2647 = vpack.c.b16 %v2431, %v2427
      %v2648 = vpack.c.b16 %v2432, %v2428
      %v2649 = vpack.c.b16 %v2433, %v2429
      %v2650 = vpack.c.b16 %v2438, %v2434
      %v2651 = vpack.c.b16 %v2439, %v2435
      %v2652 = vpack.c.b16 %v2440, %v2436
      %v2653 = vpack.c.b16 %v2441, %v2437
      %v2654 = vpack.c.b16 %v2446, %v2442
      %v2655 = vpack.c.b16 %v2447, %v2443
      %v2656 = vpack.c.b16 %v2448, %v2444
      %v2657 = vpack.c.b16 %v2449, %v2445
      %v2658 = vpack.c.b16 %v2454, %v2450
      %v2659 = vpack.c.b16 %v2455, %v2451
      %v2660 = vpack.c.b16 %v2456, %v2452
      %v2661 = vpack.c.b16 %v2457, %v2453
      %v2662 = vpack.c.b16 %v2462, %v2458
      %v2663 = vpack.c.b16 %v2463, %v2459
      %v2664 = vpack.c.b16 %v2464, %v2460
      %v2665 = vpack.c.b16 %v2465, %v2461
      %v2666 = vpack.c.b16 %v2470, %v2466
      %v2667 = vpack.c.b16 %v2471, %v2467
      %v2668 = vpack.c.b16 %v2472, %v2468
      %v2669 = vpack.c.b16 %v2473, %v2469
      %v2670 = vpack.c.b16 %v2478, %v2474
      %v2671 = vpack.c.b16 %v2479, %v2475
      %v2672 = vpack.c.b16 %v2480, %v2476
      %v2673 = vpack.c.b16 %v2481, %v2477
      %v2674 = vpack.c.b16 %v2486, %v2482
      %v2675 = vpack.c.b16 %v2487, %v2483
      %v2676 = vpack.c.b16 %v2488, %v2484
      %v2677 = vpack.c.b16 %v2489, %v2485
      %v2678 = vpack.c.b16 %v2494, %v2490
      %v2679 = vpack.c.b16 %v2495, %v2491
      %v2680 = vpack.c.b16 %v2496, %v2492
      %v2681 = vpack.c.b16 %v2497, %v2493
      %v2682 = vpack.c.b16 %v2502, %v2498
      %v2683 = vpack.c.b16 %v2503, %v2499
      %v2684 = vpack.c.b16 %v2504, %v2500
      %v2685 = vpack.c.b16 %v2505, %v2501
      %v2686 = vpack.c.b16 %v2510, %v2506
      %v2687 = vpack.c.b16 %v2511, %v2507
      %v2688 = vpack.c.b16 %v2512, %v2508
      %v2689 = vpack.c.b16 %v2513, %v2509
      %v2690 = vpack.c.b16 %v2518, %v2514
      %v2691 = vpack.c.b16 %v2519, %v2515
      %v2692 = vpack.c.b16 %v2520, %v2516
      %v2693 = vpack.c.b16 %v2521, %v2517
      %v2694 = vpack.c.b16 %v2526, %v2522
      %v2695 = vpack.c.b16 %v2527, %v2523
      %v2696 = vpack.c.b16 %v2528, %v2524
      %v2697 = vpack.c.b16 %v2529, %v2525
      %v2698 = vpack.c.b16 %v2534, %v2530
      %v2699 = vpack.c.b16 %v2535, %v2531
      %v2700 = vpack.c.b16 %v2536, %v2532
      %v2701 = vpack.c.b16 %v2537, %v2533
      %v2702 = vpack.c.b16 %v2542, %v2538
      %v2703 = vpack.c.b16 %v2543, %v2539
      %v2704 = vpack.c.b16 %v2544, %v2540
      %v2705 = vpack.c.b16 %v2545, %v2541
      %v2706 = vpack.c.b16 %v2550, %v2546
      %v2707 = vpack.c.b16 %v2551, %v2547
      %v2708 = vpack.c.b16 %v2552, %v2548
      %v2709 = vpack.c.b16 %v2553, %v2549
      %v2710 = vpack.c.b16 %v2558, %v2554
      %v2711 = vpack.c.b16 %v2559, %v2555
      %v2712 = vpack.c.b16 %v2560, %v2556
      %v2713 = vpack.c.b16 %v2561, %v2557
      %v2714 = vpack.c.b16 %v2566, %v2562
      %v2715 = vpack.c.b16 %v2567, %v2563
      %v2716 = vpack.c.b16 %v2568, %v2564
      %v2717 = vpack.c.b16 %v2569, %v2565
      %v2718 = vpack.c.b16 %v2574, %v2570
      %v2719 = vpack.c.b16 %v2575, %v2571
      %v2720 = vpack.c.b16 %v2576, %v2572
      %v2721 = vpack.c.b16 %v2577, %v2573
      %v2722 = vpack.c.b16 %v2582, %v2578
      %v2723 = vpack.c.b16 %v2583, %v2579
      %v2724 = vpack.c.b16 %v2584, %v2580
      %v2725 = vpack.c.b16 %v2585, %v2581
      %v2726 = vpack.c.b16 %v2590, %v2586
      %v2727 = vpack.c.b16 %v2591, %v2587
      %v2728 = vpack.c.b16 %v2592, %v2588
      %v2729 = vpack.c.b16 %v2593, %v2589
      %v2730 = vpack.c.b16 %v2598, %v2594
      %v2731 = vpack.c.b16 %v2599, %v2595
      %v2732 = vpack.c.b16 %v2600, %v2596
      %v2733 = vpack.c.b16 %v2601, %v2597
      %v2734 = vpack.c.b16 %v2606, %v2602
      %v2735 = vpack.c.b16 %v2607, %v2603
      %v2736 = vpack.c.b16 %v2608, %v2604
      %v2737 = vpack.c.b16 %v2609, %v2605
      %2866 = vmatprep.subr.bf16.mxu0 %v2611
      %2867 = vmatpush1.bf16.msra.mxu0 %v2610
      %2868 = vmatprep.subr.bf16.mxu0 %v2615
      %2869 = vmatpush1.bf16.msra.mxu0 %v2614
      %2870 = vmatprep.subr.bf16.mxu0 %v2619
      %2871 = vmatpush1.bf16.msra.mxu0 %v2618
      %2872 = vmatprep.subr.bf16.mxu0 %v2623
      %2873 = vmatpush1.bf16.msra.mxu0 %v2622
      %2874 = vmatprep.subr.bf16.mxu0 %v2627
      %2875 = vmatpush1.bf16.msra.mxu0 %v2626
      %2876 = vmatprep.subr.bf16.mxu0 %v2631
      %2877 = vmatpush1.bf16.msra.mxu0 %v2630
      %2878 = vmatprep.subr.bf16.mxu0 %v2635
      %2879 = vmatpush1.bf16.msra.mxu0 %v2634
      %2880 = vmatprep.subr.bf16.mxu0 %v2639
      %2881 = vmatpush1.bf16.msra.mxu0 %v2638
      %2882 = vmatprep.subr.bf16.mxu0 %v2643
      %2883 = vmatpush1.bf16.msra.mxu0 %v2642
      %2884 = vmatprep.subr.bf16.mxu0 %v2647
      %2885 = vmatpush1.bf16.msra.mxu0 %v2646
      %2886 = vmatprep.subr.bf16.mxu0 %v2651
      %2887 = vmatpush1.bf16.msra.mxu0 %v2650
      %2888 = vmatprep.subr.bf16.mxu0 %v2655
      %2889 = vmatpush1.bf16.msra.mxu0 %v2654
      %2890 = vmatprep.subr.bf16.mxu0 %v2659
      %2891 = vmatpush1.bf16.msra.mxu0 %v2658
      %2892 = vmatprep.subr.bf16.mxu0 %v2663
      %2893 = vmatpush1.bf16.msra.mxu0 %v2662
      %2894 = vmatprep.subr.bf16.mxu0 %v2667
      %2895 = vmatpush1.bf16.msra.mxu0 %v2666
      %2896 = vmatprep.subr.bf16.mxu0 %v2671
      %2897 = vmatpush1.bf16.msra.mxu0 %v2670
      %2898 = vmatprep.mubr.bf16.mxu0 %v2073
      %2899 = vmatmul.mubr.bf16.gmra.mrb[0].mxu0 %v2072
      %v2900 = vpop.f32.mrb[0].mxu0
      %v2901 = vadd.f32 %v2209, %v2900
      %v2902 = vpop.f32.mrb[0].mxu0
      %v2903 = vadd.f32 %v2213, %v2902
      %v2904 = vpop.f32.mrb[0].mxu0
      %v2905 = vadd.f32 %v2209, %v2904
      %v2906 = vpop.f32.mrb[0].mxu0
      %v2907 = vadd.f32 %v2213, %v2906
      %2908 = vdwg.mxu0
      %2909 = vmatprep.subr.bf16.mxu0 %v2675
      %2910 = vmatpush1.bf16.msra.mxu0 %v2674
      %2911 = vmatprep.subr.bf16.mxu0 %v2679
      %2912 = vmatpush1.bf16.msra.mxu0 %v2678
      %2913 = vmatprep.subr.bf16.mxu0 %v2683
      %2914 = vmatpush1.bf16.msra.mxu0 %v2682
      %2915 = vmatprep.subr.bf16.mxu0 %v2687
      %2916 = vmatpush1.bf16.msra.mxu0 %v2686
      %2917 = vmatprep.subr.bf16.mxu0 %v2691
      %2918 = vmatpush1.bf16.msra.mxu0 %v2690
      %2919 = vmatprep.subr.bf16.mxu0 %v2695
      %2920 = vmatpush1.bf16.msra.mxu0 %v2694
      %2921 = vmatprep.subr.bf16.mxu0 %v2699
      %2922 = vmatpush1.bf16.msra.mxu0 %v2698
      %2923 = vmatprep.subr.bf16.mxu0 %v2703
      %2924 = vmatpush1.bf16.msra.mxu0 %v2702
      %2925 = vmatprep.subr.bf16.mxu0 %v2707
      %2926 = vmatpush1.bf16.msra.mxu0 %v2706
      %2927 = vmatprep.subr.bf16.mxu0 %v2711
      %2928 = vmatpush1.bf16.msra.mxu0 %v2710
      %2929 = vmatprep.subr.bf16.mxu0 %v2715
      %2930 = vmatpush1.bf16.msra.mxu0 %v2714
      %2931 = vmatprep.subr.bf16.mxu0 %v2719
      %2932 = vmatpush1.bf16.msra.mxu0 %v2718
      %2933 = vmatprep.subr.bf16.mxu0 %v2723
      %2934 = vmatpush1.bf16.msra.mxu0 %v2722
      %2935 = vmatprep.subr.bf16.mxu0 %v2727
      %2936 = vmatpush1.bf16.msra.mxu0 %v2726
      %2937 = vmatprep.subr.bf16.mxu0 %v2731
      %2938 = vmatpush1.bf16.msra.mxu0 %v2730
      %2939 = vmatprep.subr.bf16.mxu0 %v2735
      %2940 = vmatpush1.bf16.msra.mxu0 %v2734
      %2941 = vmatprep.mubr.bf16.mxu0 %v2075
      %2942 = vmatmul.mubr.bf16.gmra.mrb[0].mxu0 %v2074
      %v2943 = vpop.f32.mrb[0].mxu0
      %v2944 = vadd.f32 %v2901, %v2943
      %v2945 = vpop.f32.mrb[0].mxu0
      %v2946 = vadd.f32 %v2903, %v2945
      %v2947 = vpop.f32.mrb[0].mxu0
      %v2948 = vadd.f32 %v2905, %v2947
      %v2949 = vpop.f32.mrb[0].mxu0
      %v2950 = vadd.f32 %v2907, %v2949
      %2951 = vdwg.mxu0
      %2952 = vmatprep.subr.bf16.mxu0 %v2613
      %2953 = vmatpush1.bf16.msra.mxu0 %v2612
      %2954 = vmatprep.subr.bf16.mxu0 %v2617
      %2955 = vmatpush1.bf16.msra.mxu0 %v2616
      %2956 = vmatprep.subr.bf16.mxu0 %v2621
      %2957 = vmatpush1.bf16.msra.mxu0 %v2620
      %2958 = vmatprep.subr.bf16.mxu0 %v2625
      %2959 = vmatpush1.bf16.msra.mxu0 %v2624
      %2960 = vmatprep.subr.bf16.mxu0 %v2629
      %2961 = vmatpush1.bf16.msra.mxu0 %v2628
      %2962 = vmatprep.subr.bf16.mxu0 %v2633
      %2963 = vmatpush1.bf16.msra.mxu0 %v2632
      %2964 = vmatprep.subr.bf16.mxu0 %v2637
      %2965 = vmatpush1.bf16.msra.mxu0 %v2636
      %2966 = vmatprep.subr.bf16.mxu0 %v2641
      %2967 = vmatpush1.bf16.msra.mxu0 %v2640
      %2968 = vmatprep.subr.bf16.mxu0 %v2645
      %2969 = vmatpush1.bf16.msra.mxu0 %v2644
      %2970 = vmatprep.subr.bf16.mxu0 %v2649
      %2971 = vmatpush1.bf16.msra.mxu0 %v2648
      %2972 = vmatprep.subr.bf16.mxu0 %v2653
      %2973 = vmatpush1.bf16.msra.mxu0 %v2652
      %2974 = vmatprep.subr.bf16.mxu0 %v2657
      %2975 = vmatpush1.bf16.msra.mxu0 %v2656
      %2976 = vmatprep.subr.bf16.mxu0 %v2661
      %2977 = vmatpush1.bf16.msra.mxu0 %v2660
      %2978 = vmatprep.subr.bf16.mxu0 %v2665
      %2979 = vmatpush1.bf16.msra.mxu0 %v2664
      %2980 = vmatprep.subr.bf16.mxu0 %v2669
      %2981 = vmatpush1.bf16.msra.mxu0 %v2668
      %2982 = vmatprep.subr.bf16.mxu0 %v2673
      %2983 = vmatpush1.bf16.msra.mxu0 %v2672
      %2984 = vmatprep.mubr.bf16.mxu0 %v2073
      %2985 = vmatmul.mubr.bf16.gmra.mrb[0].mxu0 %v2072
      %v2986 = vpop.f32.mrb[0].mxu0
      %v2987 = vadd.f32 %v2217, %v2986
      %v2988 = vpop.f32.mrb[0].mxu0
      %v2989 = vadd.f32 %v2221, %v2988
      %v2990 = vpop.f32.mrb[0].mxu0
      %v2991 = vadd.f32 %v2217, %v2990
      %v2992 = vpop.f32.mrb[0].mxu0
      %v2993 = vadd.f32 %v2221, %v2992
      %2994 = vdwg.mxu0
      %2995 = vmatprep.subr.bf16.mxu0 %v2677
      %2996 = vmatpush1.bf16.msra.mxu0 %v2676
      %2997 = vmatprep.subr.bf16.mxu0 %v2681
      %2998 = vmatpush1.bf16.msra.mxu0 %v2680
      %2999 = vmatprep.subr.bf16.mxu0 %v2685
      %3000 = vmatpush1.bf16.msra.mxu0 %v2684
      %3001 = vmatprep.subr.bf16.mxu0 %v2689
      %3002 = vmatpush1.bf16.msra.mxu0 %v2688
      %3003 = vmatprep.subr.bf16.mxu0 %v2693
      %3004 = vmatpush1.bf16.msra.mxu0 %v2692
      %3005 = vmatprep.subr.bf16.mxu0 %v2697
      %3006 = vmatpush1.bf16.msra.mxu0 %v2696
      %3007 = vmatprep.subr.bf16.mxu0 %v2701
      %3008 = vmatpush1.bf16.msra.mxu0 %v2700
      %3009 = vmatprep.subr.bf16.mxu0 %v2705
      %3010 = vmatpush1.bf16.msra.mxu0 %v2704
      %3011 = vmatprep.subr.bf16.mxu0 %v2709
      %3012 = vmatpush1.bf16.msra.mxu0 %v2708
      %3013 = vmatprep.subr.bf16.mxu0 %v2713
      %3014 = vmatpush1.bf16.msra.mxu0 %v2712
      %3015 = vmatprep.subr.bf16.mxu0 %v2717
      %3016 = vmatpush1.bf16.msra.mxu0 %v2716
      %3017 = vmatprep.subr.bf16.mxu0 %v2721
      %3018 = vmatpush1.bf16.msra.mxu0 %v2720
      %3019 = vmatprep.subr.bf16.mxu0 %v2725
      %3020 = vmatpush1.bf16.msra.mxu0 %v2724
      %3021 = vmatprep.subr.bf16.mxu0 %v2729
      %3022 = vmatpush1.bf16.msra.mxu0 %v2728
      %3023 = vmatprep.subr.bf16.mxu0 %v2733
      %3024 = vmatpush1.bf16.msra.mxu0 %v2732
      %3025 = vmatprep.subr.bf16.mxu0 %v2737
      %3026 = vmatpush1.bf16.msra.mxu0 %v2736
      %3027 = vmatprep.mubr.bf16.mxu0 %v2075
      %3028 = vmatmul.mubr.bf16.gmra.mrb[0].mxu0 %v2074
      %v3029 = vpop.f32.mrb[0].mxu0
      %v3030 = vadd.f32 %v2987, %v3029
      %v3031 = vpop.f32.mrb[0].mxu0
      %v3032 = vadd.f32 %v2989, %v3031
      %v3033 = vpop.f32.mrb[0].mxu0
      %v3034 = vadd.f32 %v2991, %v3033
      %v3035 = vpop.f32.mrb[0].mxu0
      %v3036 = vadd.f32 %v2993, %v3035
      %3037 = vdwg.mxu0
      %v3038 = vmax.f32 %v2944, 0.0
      %v3039 = vmax.f32 %v2946, 0.0
      %v3040 = vmax.f32 %v3030, 0.0
      %v3041 = vmax.f32 %v3032, 0.0
      %v3042 = vmax.f32 %v2948, 0.0
      %v3043 = vmax.f32 %v2950, 0.0
      %v3044 = vmax.f32 %v3034, 0.0
      %v3045 = vmax.f32 %v3036, 0.0
      %v3046 = vpack.c.bf16 %v3042, %v3038
      %v3047 = vpack.c.bf16 %v3043, %v3039
      %v3048 = vpack.c.bf16 %v3044, %v3040
      %v3049 = vpack.c.bf16 %v3045, %v3041
      %v3050 = vld [vmem:[#allocation9] sm:$0xf]
      %v3051 = vld [vmem:[#allocation9 + $0x4] sm:$0xf]
      %v3052 = vld [vmem:[#allocation9 + $0x8] sm:$0xf]
      %v3053 = vld [vmem:[#allocation9 + $0xc] sm:$0xf]
      %v3054 = vld [vmem:[#allocation9 + $0x10] sm:$0xf]
      %v3055 = vld [vmem:[#allocation9 + $0x14] sm:$0xf]
      %v3056 = vld [vmem:[#allocation9 + $0x18] sm:$0xf]
      %v3057 = vld [vmem:[#allocation9 + $0x1c] sm:$0xf]
      %v3058 = vld [vmem:[#allocation9 + $0x20] sm:$0xf]
      %v3059 = vld [vmem:[#allocation9 + $0x24] sm:$0xf]
      %v3060 = vld [vmem:[#allocation9 + $0x28] sm:$0xf]
      %v3061 = vld [vmem:[#allocation9 + $0x2c] sm:$0xf]
      %v3062 = vld [vmem:[#allocation9 + $0x30] sm:$0xf]
      %v3063 = vld [vmem:[#allocation9 + $0x34] sm:$0xf]
      %v3064 = vld [vmem:[#allocation9 + $0x38] sm:$0xf]
      %v3065 = vld [vmem:[#allocation9 + $0x3c] sm:$0xf]
      %v3066 = vld [vmem:[#allocation9 + $0x40] sm:$0xf]
      %v3067 = vld [vmem:[#allocation9 + $0x44] sm:$0xf]
      %v3068 = vld [vmem:[#allocation9 + $0x48] sm:$0xf]
      %v3069 = vld [vmem:[#allocation9 + $0x4c] sm:$0xf]
      %v3070 = vld [vmem:[#allocation9 + $0x50] sm:$0xf]
      %v3071 = vld [vmem:[#allocation9 + $0x54] sm:$0xf]
      %v3072 = vld [vmem:[#allocation9 + $0x58] sm:$0xf]
      %v3073 = vld [vmem:[#allocation9 + $0x5c] sm:$0xf]
      %v3074 = vld [vmem:[#allocation9 + $0x60] sm:$0xf]
      %v3075 = vld [vmem:[#allocation9 + $0x64] sm:$0xf]
      %v3076 = vld [vmem:[#allocation9 + $0x68] sm:$0xf]
      %v3077 = vld [vmem:[#allocation9 + $0x6c] sm:$0xf]
      %v3078 = vld [vmem:[#allocation9 + $0x70] sm:$0xf]
      %v3079 = vld [vmem:[#allocation9 + $0x74] sm:$0xf]
      %v3080 = vld [vmem:[#allocation9 + $0x78] sm:$0xf]
      %v3081 = vld [vmem:[#allocation9 + $0x7c] sm:$0xf]
      %v3082 = vld [vmem:[#allocation9 + $0x80] sm:$0xf]
      %v3083 = vld [vmem:[#allocation9 + $0x84] sm:$0xf]
      %v3084 = vld [vmem:[#allocation9 + $0x88] sm:$0xf]
      %v3085 = vld [vmem:[#allocation9 + $0x8c] sm:$0xf]
      %v3086 = vld [vmem:[#allocation9 + $0x90] sm:$0xf]
      %v3087 = vld [vmem:[#allocation9 + $0x94] sm:$0xf]
      %v3088 = vld [vmem:[#allocation9 + $0x98] sm:$0xf]
      %v3089 = vld [vmem:[#allocation9 + $0x9c] sm:$0xf]
      %v3090 = vld [vmem:[#allocation9 + $0xa0] sm:$0xf]
      %v3091 = vld [vmem:[#allocation9 + $0xa4] sm:$0xf]
      %v3092 = vld [vmem:[#allocation9 + $0xa8] sm:$0xf]
      %v3093 = vld [vmem:[#allocation9 + $0xac] sm:$0xf]
      %v3094 = vld [vmem:[#allocation9 + $0xb0] sm:$0xf]
      %v3095 = vld [vmem:[#allocation9 + $0xb4] sm:$0xf]
      %v3096 = vld [vmem:[#allocation9 + $0xb8] sm:$0xf]
      %v3097 = vld [vmem:[#allocation9 + $0xbc] sm:$0xf]
      %v3098 = vld [vmem:[#allocation9 + $0xc0] sm:$0xf]
      %v3099 = vld [vmem:[#allocation9 + $0xc4] sm:$0xf]
      %v3100 = vld [vmem:[#allocation9 + $0xc8] sm:$0xf]
      %v3101 = vld [vmem:[#allocation9 + $0xcc] sm:$0xf]
      %v3102 = vld [vmem:[#allocation9 + $0xd0] sm:$0xf]
      %v3103 = vld [vmem:[#allocation9 + $0xd4] sm:$0xf]
      %v3104 = vld [vmem:[#allocation9 + $0xd8] sm:$0xf]
      %v3105 = vld [vmem:[#allocation9 + $0xdc] sm:$0xf]
      %v3106 = vld [vmem:[#allocation9 + $0xe0] sm:$0xf]
      %v3107 = vld [vmem:[#allocation9 + $0xe4] sm:$0xf]
      %v3108 = vld [vmem:[#allocation9 + $0xe8] sm:$0xf]
      %v3109 = vld [vmem:[#allocation9 + $0xec] sm:$0xf]
      %v3110 = vld [vmem:[#allocation9 + $0xf0] sm:$0xf]
      %v3111 = vld [vmem:[#allocation9 + $0xf4] sm:$0xf]
      %v3112 = vld [vmem:[#allocation9 + $0xf8] sm:$0xf]
      %v3113 = vld [vmem:[#allocation9 + $0xfc] sm:$0xf]
      %v3114 = vld [vmem:[%s6] sm:$0x1]
      %v3116 = vlaneseq
      %v3117 = vshrl.u32 %v3116, 7
      %v3118 = vsub.s32 0, %v3117
      %v3119 = vrot.slane %v3114, %v3118
      %v3185 = vunpack.c.l.b16 %v3050
      %v3186 = vunpack.c.l.b16 %v3051
      %v3187 = vunpack.c.l.b16 %v3052
      %v3188 = vunpack.c.l.b16 %v3053
      %v3189 = vunpack.c.l.b16 %v3054
      %v3190 = vunpack.c.l.b16 %v3055
      %v3191 = vunpack.c.l.b16 %v3056
      %v3192 = vunpack.c.l.b16 %v3057
      %v3193 = vunpack.c.l.b16 %v3058
      %v3194 = vunpack.c.l.b16 %v3059
      %v3195 = vunpack.c.l.b16 %v3060
      %v3196 = vunpack.c.l.b16 %v3061
      %v3197 = vunpack.c.l.b16 %v3062
      %v3198 = vunpack.c.l.b16 %v3063
      %v3199 = vunpack.c.l.b16 %v3064
      %v3200 = vunpack.c.l.b16 %v3065
      %v3201 = vunpack.c.l.b16 %v3066
      %v3202 = vunpack.c.l.b16 %v3067
      %v3203 = vunpack.c.l.b16 %v3068
      %v3204 = vunpack.c.l.b16 %v3069
      %v3205 = vunpack.c.l.b16 %v3070
      %v3206 = vunpack.c.l.b16 %v3071
      %v3207 = vunpack.c.l.b16 %v3072
      %v3208 = vunpack.c.l.b16 %v3073
      %v3209 = vunpack.c.l.b16 %v3074
      %v3210 = vunpack.c.l.b16 %v3075
      %v3211 = vunpack.c.l.b16 %v3076
      %v3212 = vunpack.c.l.b16 %v3077
      %v3213 = vunpack.c.l.b16 %v3078
      %v3214 = vunpack.c.l.b16 %v3079
      %v3215 = vunpack.c.l.b16 %v3080
      %v3216 = vunpack.c.l.b16 %v3081
      %v3217 = vunpack.c.l.b16 %v3082
      %v3218 = vunpack.c.l.b16 %v3083
      %v3219 = vunpack.c.l.b16 %v3084
      %v3220 = vunpack.c.l.b16 %v3085
      %v3221 = vunpack.c.l.b16 %v3086
      %v3222 = vunpack.c.l.b16 %v3087
      %v3223 = vunpack.c.l.b16 %v3088
      %v3224 = vunpack.c.l.b16 %v3089
      %v3225 = vunpack.c.l.b16 %v3090
      %v3226 = vunpack.c.l.b16 %v3091
      %v3227 = vunpack.c.l.b16 %v3092
      %v3228 = vunpack.c.l.b16 %v3093
      %v3229 = vunpack.c.l.b16 %v3094
      %v3230 = vunpack.c.l.b16 %v3095
      %v3231 = vunpack.c.l.b16 %v3096
      %v3232 = vunpack.c.l.b16 %v3097
      %v3233 = vunpack.c.l.b16 %v3098
      %v3234 = vunpack.c.l.b16 %v3099
      %v3235 = vunpack.c.l.b16 %v3100
      %v3236 = vunpack.c.l.b16 %v3101
      %v3237 = vunpack.c.l.b16 %v3102
      %v3238 = vunpack.c.l.b16 %v3103
      %v3239 = vunpack.c.l.b16 %v3104
      %v3240 = vunpack.c.l.b16 %v3105
      %v3241 = vunpack.c.l.b16 %v3106
      %v3242 = vunpack.c.l.b16 %v3107
      %v3243 = vunpack.c.l.b16 %v3108
      %v3244 = vunpack.c.l.b16 %v3109
      %v3245 = vunpack.c.l.b16 %v3110
      %v3246 = vunpack.c.l.b16 %v3111
      %v3247 = vunpack.c.l.b16 %v3112
      %v3248 = vunpack.c.l.b16 %v3113
      %v3249 = vpack.c.b16 %v3186, %v3185
      %v3250 = vpack.c.b16 %v3188, %v3187
      %v3251 = vpack.c.b16 %v3190, %v3189
      %v3252 = vpack.c.b16 %v3192, %v3191
      %v3253 = vpack.c.b16 %v3194, %v3193
      %v3254 = vpack.c.b16 %v3196, %v3195
      %v3255 = vpack.c.b16 %v3198, %v3197
      %v3256 = vpack.c.b16 %v3200, %v3199
      %v3257 = vpack.c.b16 %v3202, %v3201
      %v3258 = vpack.c.b16 %v3204, %v3203
      %v3259 = vpack.c.b16 %v3206, %v3205
      %v3260 = vpack.c.b16 %v3208, %v3207
      %v3261 = vpack.c.b16 %v3210, %v3209
      %v3262 = vpack.c.b16 %v3212, %v3211
      %v3263 = vpack.c.b16 %v3214, %v3213
      %v3264 = vpack.c.b16 %v3216, %v3215
      %v3265 = vpack.c.b16 %v3218, %v3217
      %v3266 = vpack.c.b16 %v3220, %v3219
      %v3267 = vpack.c.b16 %v3222, %v3221
      %v3268 = vpack.c.b16 %v3224, %v3223
      %v3269 = vpack.c.b16 %v3226, %v3225
      %v3270 = vpack.c.b16 %v3228, %v3227
      %v3271 = vpack.c.b16 %v3230, %v3229
      %v3272 = vpack.c.b16 %v3232, %v3231
      %v3273 = vpack.c.b16 %v3234, %v3233
      %v3274 = vpack.c.b16 %v3236, %v3235
      %v3275 = vpack.c.b16 %v3238, %v3237
      %v3276 = vpack.c.b16 %v3240, %v3239
      %v3277 = vpack.c.b16 %v3242, %v3241
      %v3278 = vpack.c.b16 %v3244, %v3243
      %v3279 = vpack.c.b16 %v3246, %v3245
      %v3280 = vpack.c.b16 %v3248, %v3247
      %3313 = vmatprep.subr.bf16.mxu0 0
      %3314 = vmatpush1.bf16.msra.mxu0 %v3249
      %3315 = vmatprep.subr.bf16.mxu0 0
      %3316 = vmatpush1.bf16.msra.mxu0 %v3250
      %3317 = vmatprep.subr.bf16.mxu0 0
      %3318 = vmatpush1.bf16.msra.mxu0 %v3251
      %3319 = vmatprep.subr.bf16.mxu0 0
      %3320 = vmatpush1.bf16.msra.mxu0 %v3252
      %3321 = vmatprep.subr.bf16.mxu0 0
      %3322 = vmatpush1.bf16.msra.mxu0 %v3253
      %3323 = vmatprep.subr.bf16.mxu0 0
      %3324 = vmatpush1.bf16.msra.mxu0 %v3254
      %3325 = vmatprep.subr.bf16.mxu0 0
      %3326 = vmatpush1.bf16.msra.mxu0 %v3255
      %3327 = vmatprep.subr.bf16.mxu0 0
      %3328 = vmatpush1.bf16.msra.mxu0 %v3256
      %3329 = vmatprep.subr.bf16.mxu0 0
      %3330 = vmatpush1.bf16.msra.mxu0 %v3257
      %3331 = vmatprep.subr.bf16.mxu0 0
      %3332 = vmatpush1.bf16.msra.mxu0 %v3258
      %3333 = vmatprep.subr.bf16.mxu0 0
      %3334 = vmatpush1.bf16.msra.mxu0 %v3259
      %3335 = vmatprep.subr.bf16.mxu0 0
      %3336 = vmatpush1.bf16.msra.mxu0 %v3260
      %3337 = vmatprep.subr.bf16.mxu0 0
      %3338 = vmatpush1.bf16.msra.mxu0 %v3261
      %3339 = vmatprep.subr.bf16.mxu0 0
      %3340 = vmatpush1.bf16.msra.mxu0 %v3262
      %3341 = vmatprep.subr.bf16.mxu0 0
      %3342 = vmatpush1.bf16.msra.mxu0 %v3263
      %3343 = vmatprep.subr.bf16.mxu0 0
      %3344 = vmatpush1.bf16.msra.mxu0 %v3264
      %3345 = vmatprep.mubr.bf16.mxu0 %v3047
      %3346 = vmatmul.mubr.bf16.gmra.mrb[0].mxu0 %v3046
      %v3347 = vpop.f32.mrb[0].mxu0
      %v3348 = vadd.f32 %v3119, %v3347
      %v3349 = vpop.f32.mrb[0].mxu0
      %v3350 = vpop.f32.mrb[0].mxu0
      %v3351 = vadd.f32 %v3119, %v3350
      %v3352 = vpop.f32.mrb[0].mxu0
      %3353 = vdwg.mxu0
      %3354 = vmatprep.subr.bf16.mxu0 0
      %3355 = vmatpush1.bf16.msra.mxu0 %v3265
      %3356 = vmatprep.subr.bf16.mxu0 0
      %3357 = vmatpush1.bf16.msra.mxu0 %v3266
      %3358 = vmatprep.subr.bf16.mxu0 0
      %3359 = vmatpush1.bf16.msra.mxu0 %v3267
      %3360 = vmatprep.subr.bf16.mxu0 0
      %3361 = vmatpush1.bf16.msra.mxu0 %v3268
      %3362 = vmatprep.subr.bf16.mxu0 0
      %3363 = vmatpush1.bf16.msra.mxu0 %v3269
      %3364 = vmatprep.subr.bf16.mxu0 0
      %3365 = vmatpush1.bf16.msra.mxu0 %v3270
      %3366 = vmatprep.subr.bf16.mxu0 0
      %3367 = vmatpush1.bf16.msra.mxu0 %v3271
      %3368 = vmatprep.subr.bf16.mxu0 0
      %3369 = vmatpush1.bf16.msra.mxu0 %v3272
      %3370 = vmatprep.subr.bf16.mxu0 0
      %3371 = vmatpush1.bf16.msra.mxu0 %v3273
      %3372 = vmatprep.subr.bf16.mxu0 0
      %3373 = vmatpush1.bf16.msra.mxu0 %v3274
      %3374 = vmatprep.subr.bf16.mxu0 0
      %3375 = vmatpush1.bf16.msra.mxu0 %v3275
      %3376 = vmatprep.subr.bf16.mxu0 0
      %3377 = vmatpush1.bf16.msra.mxu0 %v3276
      %3378 = vmatprep.subr.bf16.mxu0 0
      %3379 = vmatpush1.bf16.msra.mxu0 %v3277
      %3380 = vmatprep.subr.bf16.mxu0 0
      %3381 = vmatpush1.bf16.msra.mxu0 %v3278
      %3382 = vmatprep.subr.bf16.mxu0 0
      %3383 = vmatpush1.bf16.msra.mxu0 %v3279
      %3384 = vmatprep.subr.bf16.mxu0 0
      %3385 = vmatpush1.bf16.msra.mxu0 %v3280
      %3386 = vmatprep.mubr.bf16.mxu0 %v3049
      %3387 = vmatmul.mubr.bf16.gmra.mrb[0].mxu0 %v3048
      %v3388 = vpop.f32.mrb[0].mxu0
      %v3389 = vadd.f32 %v3348, %v3388
      %v3390 = vpop.f32.mrb[0].mxu0
      %v3391 = vpop.f32.mrb[0].mxu0
      %v3392 = vadd.f32 %v3351, %v3391
      %v3393 = vpop.f32.mrb[0].mxu0
      %3394 = vdwg.mxu0
      %3395 = vst [vmem:[#allocation11] sm:$0xff] %v3389
      %3396 = vst [vmem:[#allocation11 + $0x8] sm:$0xff] %v3392
    $region53: #{tpu_custom_call.1} parent=1 // pred_fallthru
      _
    // Predicated region
    $region54: #{tpu_custom_call.1} parent=1 // pred_check
      _
    $region55: #{tpu_custom_call.1} parent=1 // pred_check_branch
      %3398 = sbr.rel (0) target = $region57
    $region56: #{tpu_custom_call.1} parent=1 // pred_region
      %s3400 = ssub.s32 256, 256
      %3401 = vsyncadd [#allocation5], %s3400
      %s3402 = sshll.u32 [#allocation11], 4
      %s3403 = int_to_ptr.vmem [resolvable:$true] %s3402
      %3408 = dma.vmem_to_hbm [thread:$0]  %s3403, 256, %s7, [#allocation5], 128, 128, 8
    $region57: #{tpu_custom_call.1} parent=1 // pred_fallthru
      _
    // Predicated region
    $region58: #{tpu_custom_call.1} parent=1 // pred_check
      _
    $region59: #{tpu_custom_call.1} parent=1 // pred_check_branch
      %3410 = sbr.rel (0) target = $region61
    $region60: #{tpu_custom_call.1} parent=1 // pred_region
      %3411 = dma.done [#allocation5], 256
    $region61: #{tpu_custom_call.1} parent=1 // pred_fallthru
      _
    %3412 = vsyncpa [#allocation4], 1
    %3413 = vsyncpa [#allocation7], 1
    %3414 = vsyncpa [#allocation10], 1
    %3415 = vsyncpa [#allocation5], 1

</llo_original>
